<compile_context>
chip_gen: v6e
topology: v6e:2x2x1
jax: 0.10.0
libtpu: 0.0.40
codegen_flags: <defaults>
</compile_context>

<pallas_src>
import jax
import jax.numpy as jnp
from jax.experimental import pallas as pl
from jax.experimental.pallas import tpu as pltpu


Z_DIM, H1, H2, OUT = 100, 256, 512, 28 * 28
Z_PAD = 128          # layer-1 K padded to a lane-aligned 128
MAX_TILE = 512       # rows per grid step (VMEM footprint ~ a few MiB, safe on all gens)


def _round_up(x, m):
    return ((x + m - 1) // m) * m


def _generator_kernel(x_ref, w1_ref, b1_ref, w2_ref, b2_ref, w3_ref, b3_ref, o_ref):
    # Layer 1: Linear(100->256), K zero-padded to 128.  bf16 MXU, f32 accumulate.
    h1 = jnp.dot(x_ref[...], w1_ref[...], preferred_element_type=jnp.float32)
    h1 = jnp.maximum(h1 + b1_ref[...], 0.0)                      # bias + ReLU in f32
    # Layer 2: Linear(256->512) + ReLU.
    h2 = jnp.dot(h1.astype(jnp.bfloat16), w2_ref[...],
                 preferred_element_type=jnp.float32)
    h2 = jnp.maximum(h2 + b2_ref[...], 0.0)
    # Layer 3: Linear(512->784) + tanh (EUP, f32), stored as bf16.
    o = jnp.dot(h2.astype(jnp.bfloat16), w3_ref[...],
                preferred_element_type=jnp.float32)
    o_ref[...] = jnp.tanh(o + b3_ref[...]).astype(o_ref.dtype)


def prepare_params(params):
    """One-time weight prep (hoisted out of the per-call path):
    pad layer-1 K 100->128, cast weights to bf16, biases to f32 row vectors."""
    w1, b1, w2, b2, w3, b3 = params
    w1_p = jnp.zeros((Z_PAD, H1), jnp.bfloat16).at[:Z_DIM, :].set(
        w1.astype(jnp.bfloat16))
    return (
        w1_p,
        jnp.reshape(b1, (1, H1)).astype(jnp.float32),
        w2.astype(jnp.bfloat16),
        jnp.reshape(b2, (1, H2)).astype(jnp.float32),
        w3.astype(jnp.bfloat16),
        jnp.reshape(b3, (1, OUT)).astype(jnp.float32),
    )


def _num_tensorcores():
    """Best-effort TC-per-chip count (2 on v7x, 1 on v5e/v6e)."""
    try:
        kind = jax.devices()[0].device_kind.lower()
        if "v7" in kind:
            return 2
    except Exception:
        pass
    return 1


def _choose_tile(n, n_cores):
    # Fewest steps with tile <= MAX_TILE (amortize ~0.35us/step on single-TC chips).
    steps = max(1, -(-n // MAX_TILE))
    # On multi-TC chips with a reasonably large batch, keep steps a multiple of
    # the core count so the "parallel" grid axis shards with balanced work.
    if n_cores > 1 and n >= 256:
        steps = -(-steps // n_cores) * n_cores
    # Right-size the tile to the batch; multiple of 16 for bf16 sublane packing.
    tile = _round_up(-(-n // steps), 16)
    return tile, steps


def generator_forward(x, prepped, *, out_dtype=jnp.bfloat16):
    """x: (N, 100) float32  ->  (N, 28, 28, 1) `out_dtype` (default bf16)."""
    w1_p, b1_f, w2_b, b2_f, w3_b, b3_f = prepped
    n = x.shape[0]

    tile, steps = _choose_tile(n, _num_tensorcores())
    n_pad = tile * steps

    # Per-call input prep only: pad batch rows + K, cast to bf16 (tiny tensor).
    x_p = jnp.zeros((n_pad, Z_PAD), jnp.bfloat16).at[:n, :Z_DIM].set(
        x.astype(jnp.bfloat16))

    rows = lambda i: (i, 0)          # batch-tiled arrays
    const = lambda i: (0, 0)         # weights / biases: same block every step
    single = pl.Buffered(1)          # constants never re-fetched -> 1 buffer

    flops = 2 * n_pad * (Z_PAD * H1 + H1 * H2 + H2 * OUT)
    bytes_accessed = (
        x_p.size * 2 + w1_p.size * 2 + w2_b.size * 2 + w3_b.size * 2
        + (b1_f.size + b2_f.size + b3_f.size) * 4
        + n_pad * OUT * jnp.dtype(out_dtype).itemsize
    )

    flat = pl.pallas_call(
        _generator_kernel,
        out_shape=jax.ShapeDtypeStruct((n_pad, OUT), out_dtype),
        grid_spec=pltpu.PrefetchScalarGridSpec(
            num_scalar_prefetch=0,
            grid=(steps,),
            in_specs=[
                pl.BlockSpec((tile, Z_PAD), rows),                        # x
                pl.BlockSpec((Z_PAD, H1), const, pipeline_mode=single),   # w1
                pl.BlockSpec((1, H1), const, pipeline_mode=single),       # b1
                pl.BlockSpec((H1, H2), const, pipeline_mode=single),      # w2
                pl.BlockSpec((1, H2), const, pipeline_mode=single),       # b2
                pl.BlockSpec((H2, OUT), const, pipeline_mode=single),     # w3
                pl.BlockSpec((1, OUT), const, pipeline_mode=single),      # b3
            ],
            # 784 equals the full last dim of the output array -> legal block,
            # no lane padding, no post-kernel depad pass.
            out_specs=pl.BlockSpec((tile, OUT), rows),
        ),
        compiler_params=pltpu.CompilerParams(
            dimension_semantics=("parallel",),
        ),
        cost_estimate=pl.CostEstimate(
            flops=flops,
            transcendentals=n_pad * OUT,
            bytes_accessed=bytes_accessed,
        ),
    )(x_p, w1_p, b1_f, w2_b, b2_f, w3_b, b3_f)

    if n_pad != n:               # drop batch-row padding only when present
        flat = flat[:n]
    return flat.reshape(-1, 28, 28, 1)   # matches torch .view(-1, 28, 28, 1)


def init_params(key):
    """Deterministic init mimicking torch.nn.Linear (U[-1/sqrt(fan_in), +1/sqrt(fan_in)])."""
    ks = jax.random.split(key, 6)

    def linear(kw, kb, fan_in, fan_out):
        bound = 1.0 / jnp.sqrt(fan_in)
        w = jax.random.uniform(kw, (fan_in, fan_out), jnp.float32, -bound, bound)
        b = jax.random.uniform(kb, (1, fan_out), jnp.float32, -bound, bound)
        return w, b

    w1, b1 = linear(ks[0], ks[1], Z_DIM, H1)
    w2, b2 = linear(ks[2], ks[3], H1, H2)
    w3, b3 = linear(ks[4], ks[5], H2, OUT)
    return (w1, b1, w2, b2, w3, b3)


if __name__ == "__main__":
    key = jax.random.PRNGKey(0)
    k_param, k_x = jax.random.split(key)
    params = init_params(k_param)
    prepped = prepare_params(params)           # one-time weight prep
    w1, b1, w2, b2, w3, b3 = params

    def ref_forward(x):  # plain-JAX f32 reference of the same math
        h1 = jnp.maximum(x @ w1 + b1, 0.0)
        h2 = jnp.maximum(h1 @ w2 + b2, 0.0)
        return jnp.tanh(h2 @ w3 + b3).reshape(-1, 28, 28, 1)

    # small odd batch (exercises batch padding + 16-row min tile) and a batch
    # big enough to exercise the tile/grid selection path
    for batch in (4, 300):
        x = jax.random.normal(jax.random.fold_in(k_x, batch),
                              (batch, Z_DIM), jnp.float32)
        img = jax.block_until_ready(generator_forward(x, prepped))
        ref = ref_forward(x)
        assert img.shape == (batch, 28, 28, 1)
        # bf16 matmul inputs + bf16 output -> loosened tolerance vs f32 reference
        err = float(jnp.max(jnp.abs(img.astype(jnp.float32) - ref)))
        assert err < 4e-2, err

    print("KERNEL_OK")
</pallas_src>

<mosaic_0001>
module attributes {stable_mosaic.version = 11 : i64} {
  func.func @_generator_kernel(%arg0: i32, %arg1: memref<16x128xbf16, #tpu.memory_space<vmem>>, %arg2: memref<128x256xbf16, #tpu.memory_space<vmem>>, %arg3: memref<1x256xf32, #tpu.memory_space<vmem>>, %arg4: memref<256x512xbf16, #tpu.memory_space<vmem>>, %arg5: memref<1x512xf32, #tpu.memory_space<vmem>>, %arg6: memref<512x784xbf16, #tpu.memory_space<vmem>>, %arg7: memref<1x784xf32, #tpu.memory_space<vmem>>, %arg8: memref<16x784xbf16, #tpu.memory_space<vmem>>) attributes {dimension_semantics = [#tpu.dimension_semantics<parallel>], iteration_bounds = array<i64: 1>, scalar_prefetch = 0 : i64, scratch_operands = 0 : i64, tpu.core_type = #tpu.core_type<tc>, window_params = [{transform_indices = @transform_0, window_bounds = array<i64: 16, 128>}, {pipeline_mode = #tpu.pipeline_mode<synchronous>, transform_indices = @transform_1, window_bounds = array<i64: 128, 256>}, {pipeline_mode = #tpu.pipeline_mode<synchronous>, transform_indices = @transform_2, window_bounds = array<i64: 1, 256>}, {pipeline_mode = #tpu.pipeline_mode<synchronous>, transform_indices = @transform_3, window_bounds = array<i64: 256, 512>}, {pipeline_mode = #tpu.pipeline_mode<synchronous>, transform_indices = @transform_4, window_bounds = array<i64: 1, 512>}, {pipeline_mode = #tpu.pipeline_mode<synchronous>, transform_indices = @transform_5, window_bounds = array<i64: 512, 784>}, {pipeline_mode = #tpu.pipeline_mode<synchronous>, transform_indices = @transform_6, window_bounds = array<i64: 1, 784>}, {transform_indices = @transform_7, window_bounds = array<i64: 16, 784>}]} {
    %c0 = arith.constant 0 : index
    %c0_0 = arith.constant 0 : index
    %0 = vector.load %arg1[%c0, %c0_0] : memref<16x128xbf16, #tpu.memory_space<vmem>>, vector<16x128xbf16>
    %c0_1 = arith.constant 0 : index
    %c0_2 = arith.constant 0 : index
    %1 = vector.load %arg2[%c0_1, %c0_2] : memref<128x256xbf16, #tpu.memory_space<vmem>>, vector<128x256xbf16>
    %cst = arith.constant dense<0.000000e+00> : vector<16x256xf32>
    %2 = tpu.matmul %0, %1, %cst {dimension_numbers = #tpu.dot_dimension_numbers<[1], [0], [0], [1], [0, 0, 1, 1], [], []>} : vector<16x128xbf16>, vector<128x256xbf16>, vector<16x256xf32> -> vector<16x256xf32>
    %c0_3 = arith.constant 0 : index
    %c0_4 = arith.constant 0 : index
    %3 = vector.load %arg3[%c0_3, %c0_4] : memref<1x256xf32, #tpu.memory_space<vmem>>, vector<1x256xf32>
    %4 = vector.broadcast %3 : vector<1x256xf32> to vector<16x256xf32>
    %5 = arith.addf %2, %4 : vector<16x256xf32>
    %cst_5 = arith.constant 0.000000e+00 : f32
    %6 = vector.broadcast %cst_5 : f32 to vector<16x256xf32>
    %7 = arith.maximumf %5, %6 : vector<16x256xf32>
    %8 = arith.truncf %7 : vector<16x256xf32> to vector<16x256xbf16>
    %c0_6 = arith.constant 0 : index
    %c0_7 = arith.constant 0 : index
    %9 = vector.load %arg4[%c0_6, %c0_7] : memref<256x512xbf16, #tpu.memory_space<vmem>>, vector<256x512xbf16>
    %cst_8 = arith.constant dense<0.000000e+00> : vector<16x512xf32>
    %10 = tpu.matmul %8, %9, %cst_8 {dimension_numbers = #tpu.dot_dimension_numbers<[1], [0], [0], [1], [0, 0, 1, 1], [], []>} : vector<16x256xbf16>, vector<256x512xbf16>, vector<16x512xf32> -> vector<16x512xf32>
    %c0_9 = arith.constant 0 : index
    %c0_10 = arith.constant 0 : index
    %11 = vector.load %arg5[%c0_9, %c0_10] : memref<1x512xf32, #tpu.memory_space<vmem>>, vector<1x512xf32>
    %12 = vector.broadcast %11 : vector<1x512xf32> to vector<16x512xf32>
    %13 = arith.addf %10, %12 : vector<16x512xf32>
    %cst_11 = arith.constant 0.000000e+00 : f32
    %14 = vector.broadcast %cst_11 : f32 to vector<16x512xf32>
    %15 = arith.maximumf %13, %14 : vector<16x512xf32>
    %16 = arith.truncf %15 : vector<16x512xf32> to vector<16x512xbf16>
    %c0_12 = arith.constant 0 : index
    %c0_13 = arith.constant 0 : index
    %17 = vector.load %arg6[%c0_12, %c0_13] : memref<512x784xbf16, #tpu.memory_space<vmem>>, vector<512x784xbf16>
    %cst_14 = arith.constant dense<0.000000e+00> : vector<16x784xf32>
    %18 = tpu.matmul %16, %17, %cst_14 {dimension_numbers = #tpu.dot_dimension_numbers<[1], [0], [0], [1], [0, 0, 1, 1], [], []>} : vector<16x512xbf16>, vector<512x784xbf16>, vector<16x784xf32> -> vector<16x784xf32>
    %c0_15 = arith.constant 0 : index
    %c0_16 = arith.constant 0 : index
    %19 = vector.load %arg7[%c0_15, %c0_16] : memref<1x784xf32, #tpu.memory_space<vmem>>, vector<1x784xf32>
    %20 = vector.broadcast %19 : vector<1x784xf32> to vector<16x784xf32>
    %21 = arith.addf %18, %20 : vector<16x784xf32>
    %22 = math.tanh %21 : vector<16x784xf32>
    %23 = arith.truncf %22 : vector<16x784xf32> to vector<16x784xbf16>
    %c0_17 = arith.constant 0 : index
    %c0_18 = arith.constant 0 : index
    %24 = vector.load %arg8[%c0_17, %c0_18] : memref<16x784xbf16, #tpu.memory_space<vmem>>, vector<16x784xbf16>
    tpu.vector_store %arg8[%c0_17, %c0_18], %23 {strides = array<i32>} : memref<16x784xbf16, #tpu.memory_space<vmem>>, vector<16x784xbf16>,
    return
  }
  func.func @transform_0(%arg0: i32) -> (i32, i32) {
    %c0_i32 = arith.constant 0 : i32
    %c0_i32_0 = arith.constant 0 : i32
    return %arg0, %c0_i32 : i32, i32
  }
  func.func @transform_1(%arg0: i32) -> (i32, i32) {
    %c0_i32 = arith.constant 0 : i32
    %c0_i32_0 = arith.constant 0 : i32
    %c0_i32_1 = arith.constant 0 : i32
    return %c0_i32, %c0_i32_0 : i32, i32
  }
  func.func @transform_2(%arg0: i32) -> (i32, i32) {
    %c0_i32 = arith.constant 0 : i32
    %c0_i32_0 = arith.constant 0 : i32
    %c0_i32_1 = arith.constant 0 : i32
    return %c0_i32, %c0_i32_0 : i32, i32
  }
  func.func @transform_3(%arg0: i32) -> (i32, i32) {
    %c0_i32 = arith.constant 0 : i32
    %c0_i32_0 = arith.constant 0 : i32
    %c0_i32_1 = arith.constant 0 : i32
    return %c0_i32, %c0_i32_0 : i32, i32
  }
  func.func @transform_4(%arg0: i32) -> (i32, i32) {
    %c0_i32 = arith.constant 0 : i32
    %c0_i32_0 = arith.constant 0 : i32
    %c0_i32_1 = arith.constant 0 : i32
    return %c0_i32, %c0_i32_0 : i32, i32
  }
  func.func @transform_5(%arg0: i32) -> (i32, i32) {
    %c0_i32 = arith.constant 0 : i32
    %c0_i32_0 = arith.constant 0 : i32
    %c0_i32_1 = arith.constant 0 : i32
    return %c0_i32, %c0_i32_0 : i32, i32
  }
  func.func @transform_6(%arg0: i32) -> (i32, i32) {
    %c0_i32 = arith.constant 0 : i32
    %c0_i32_0 = arith.constant 0 : i32
    %c0_i32_1 = arith.constant 0 : i32
    return %c0_i32, %c0_i32_0 : i32, i32
  }
  func.func @transform_7(%arg0: i32) -> (i32, i32) {
    %c0_i32 = arith.constant 0 : i32
    %c0_i32_0 = arith.constant 0 : i32
    return %arg0, %c0_i32 : i32, i32
  }
}

</mosaic_0001>

<llo_original>
// kernel: tpu_custom_call.1
$region0: #{tpu_custom_call.1}
  #allocation0 [shape = 'u32[]', space=smem, size = 0x4, offset = 0x4, fixed_abs, tag = 'smem constant byte address 0x4 - core index']
  #allocation1 [shape = 'u32[144,128]{1,0:T(1,128)}', space=vmem, size = 0x12000, scoped, tag = 'internal scratch']
  %s0 = inlined_call_operand.vmem [shape: bf16[16,128], index: 0, kind: input, shape index: {}]
  %s1 = inlined_call_operand.vmem [shape: bf16[128,256], index: 1, kind: input, shape index: {}]
  %s2 = inlined_call_operand.vmem [shape: f32[1,256], index: 2, kind: input, shape index: {}]
  %s3 = inlined_call_operand.vmem [shape: bf16[256,512], index: 3, kind: input, shape index: {}]
  %s4 = inlined_call_operand.vmem [shape: f32[1,512], index: 4, kind: input, shape index: {}]
  %s5 = inlined_call_operand.vmem [shape: bf16[512,784], index: 5, kind: input, shape index: {}]
  %s6 = inlined_call_operand.vmem [shape: f32[1,784], index: 6, kind: input, shape index: {}]
  %s7 = inlined_call_operand.hbm [shape: bf16[16,784], index: 7, kind: output, shape index: {}]
  %s8 = sld [smem:[#allocation0]]
  $region38: #{tpu_custom_call.1} parent=0
    _
  %s10 = ssub.s32 1, %s8
  %s11 = scalar_select 0, %s10, %s8
  $region1: #{tpu_custom_call.1} parent=0
    #allocation2 [shape = 'u8[28672]{0}', space=vmem, size = 0x7000, scoped, tag = 'output window, operand 0, single buffered']
    #allocation3 [shape = 's32[1]{0}', space=sflag, size = 0x4, scoped, tag = 'scoped memory for tpu_custom_call.1']
    %12 = vsyncpa [#allocation3], 0
    // Predicated region
    $region2: #{tpu_custom_call.1} parent=1 // pred_check
      _
    $region3: #{tpu_custom_call.1} parent=1 // pred_check_branch
      %14 = sbr.rel (0) target = $region5
    $region4: #{tpu_custom_call.1} parent=1 // pred_region
      _
    $region5: #{tpu_custom_call.1} parent=1 // pred_fallthru
      _
    // Predicated region
    $region6: #{tpu_custom_call.1} parent=1 // pred_check
      _
    $region7: #{tpu_custom_call.1} parent=1 // pred_check_branch
      %16 = sbr.rel (0) target = $region9
    $region8: #{tpu_custom_call.1} parent=1 // pred_region
      _
    $region9: #{tpu_custom_call.1} parent=1 // pred_fallthru
      _
    // Predicated region
    $region10: #{tpu_custom_call.1} parent=1 // pred_check
      _
    $region11: #{tpu_custom_call.1} parent=1 // pred_check_branch
      %18 = sbr.rel (0) target = $region13
    $region12: #{tpu_custom_call.1} parent=1 // pred_region
      _
    $region13: #{tpu_custom_call.1} parent=1 // pred_fallthru
      _
    // Predicated region
    $region14: #{tpu_custom_call.1} parent=1 // pred_check
      _
    $region15: #{tpu_custom_call.1} parent=1 // pred_check_branch
      %20 = sbr.rel (0) target = $region17
    $region16: #{tpu_custom_call.1} parent=1 // pred_region
      _
    $region17: #{tpu_custom_call.1} parent=1 // pred_fallthru
      _
    // Predicated region
    $region18: #{tpu_custom_call.1} parent=1 // pred_check
      _
    $region19: #{tpu_custom_call.1} parent=1 // pred_check_branch
      %22 = sbr.rel (0) target = $region21
    $region20: #{tpu_custom_call.1} parent=1 // pred_region
      _
    $region21: #{tpu_custom_call.1} parent=1 // pred_fallthru
      _
    // Predicated region
    $region22: #{tpu_custom_call.1} parent=1 // pred_check
      _
    $region23: #{tpu_custom_call.1} parent=1 // pred_check_branch
      %24 = sbr.rel (0) target = $region25
    $region24: #{tpu_custom_call.1} parent=1 // pred_region
      _
    $region25: #{tpu_custom_call.1} parent=1 // pred_fallthru
      _
    // Predicated region
    $region26: #{tpu_custom_call.1} parent=1 // pred_check
      _
    $region27: #{tpu_custom_call.1} parent=1 // pred_check_branch
      %26 = sbr.rel (0) target = $region29
    $region28: #{tpu_custom_call.1} parent=1 // pred_region
      _
    $region29: #{tpu_custom_call.1} parent=1 // pred_fallthru
      _
    %v28 = vld [vmem:[%s0] sm:$0xf]
    %v29 = vld [vmem:[%s0 + $0x4] sm:$0xf]
    %v30 = vld [vmem:[%s1] sm:$0xff]
    %v31 = vld [vmem:[%s1 + $0x8] sm:$0xff]
    %v32 = vld [vmem:[%s1 + $0x10] sm:$0xff]
    %v33 = vld [vmem:[%s1 + $0x18] sm:$0xff]
    %v34 = vld [vmem:[%s1 + $0x20] sm:$0xff]
    %v35 = vld [vmem:[%s1 + $0x28] sm:$0xff]
    %v36 = vld [vmem:[%s1 + $0x30] sm:$0xff]
    %v37 = vld [vmem:[%s1 + $0x38] sm:$0xff]
    %v38 = vld [vmem:[%s1 + $0x40] sm:$0xff]
    %v39 = vld [vmem:[%s1 + $0x48] sm:$0xff]
    %v40 = vld [vmem:[%s1 + $0x50] sm:$0xff]
    %v41 = vld [vmem:[%s1 + $0x58] sm:$0xff]
    %v42 = vld [vmem:[%s1 + $0x60] sm:$0xff]
    %v43 = vld [vmem:[%s1 + $0x68] sm:$0xff]
    %v44 = vld [vmem:[%s1 + $0x70] sm:$0xff]
    %v45 = vld [vmem:[%s1 + $0x78] sm:$0xff]
    %v46 = vld [vmem:[%s2] sm:$0x3]
    %v48 = vlaneseq
    %v49 = vshrl.u32 %v48, 7
    %v50 = vsub.s32 0, %v49
    %v51 = vrot.slane %v46, %v50
    %v52 = vlaneseq
    %v53 = vshrl.u32 %v52, 7
    %v54 = vsub.s32 1, %v53
    %v55 = vrot.slane %v46, %v54
    %v60 = vunpack.c.l.b16 %v28
    %v61 = vunpack.c.l.b16 %v29
    %v62 = vpack.c.b16 %v61, %v60
    %v80 = vunpack.c.l.b16 %v30
    %v81 = vunpack.c.h.b16 %v30
    %v82 = vunpack.c.l.b16 %v31
    %v83 = vunpack.c.h.b16 %v31
    %v84 = vunpack.c.l.b16 %v32
    %v85 = vunpack.c.h.b16 %v32
    %v86 = vunpack.c.l.b16 %v33
    %v87 = vunpack.c.h.b16 %v33
    %v88 = vunpack.c.l.b16 %v34
    %v89 = vunpack.c.h.b16 %v34
    %v90 = vunpack.c.l.b16 %v35
    %v91 = vunpack.c.h.b16 %v35
    %v92 = vunpack.c.l.b16 %v36
    %v93 = vunpack.c.h.b16 %v36
    %v94 = vunpack.c.l.b16 %v37
    %v95 = vunpack.c.h.b16 %v37
    %v96 = vunpack.c.l.b16 %v38
    %v97 = vunpack.c.h.b16 %v38
    %v98 = vunpack.c.l.b16 %v39
    %v99 = vunpack.c.h.b16 %v39
    %v100 = vunpack.c.l.b16 %v40
    %v101 = vunpack.c.h.b16 %v40
    %v102 = vunpack.c.l.b16 %v41
    %v103 = vunpack.c.h.b16 %v41
    %v104 = vunpack.c.l.b16 %v42
    %v105 = vunpack.c.h.b16 %v42
    %v106 = vunpack.c.l.b16 %v43
    %v107 = vunpack.c.h.b16 %v43
    %v108 = vunpack.c.l.b16 %v44
    %v109 = vunpack.c.h.b16 %v44
    %v110 = vunpack.c.l.b16 %v45
    %v111 = vunpack.c.h.b16 %v45
    %v112 = vpack.c.b16 %v82, %v80
    %v113 = vpack.c.b16 %v83, %v81
    %v114 = vpack.c.b16 %v86, %v84
    %v115 = vpack.c.b16 %v87, %v85
    %v116 = vpack.c.b16 %v90, %v88
    %v117 = vpack.c.b16 %v91, %v89
    %v118 = vpack.c.b16 %v94, %v92
    %v119 = vpack.c.b16 %v95, %v93
    %v120 = vpack.c.b16 %v98, %v96
    %v121 = vpack.c.b16 %v99, %v97
    %v122 = vpack.c.b16 %v102, %v100
    %v123 = vpack.c.b16 %v103, %v101
    %v124 = vpack.c.b16 %v106, %v104
    %v125 = vpack.c.b16 %v107, %v105
    %v126 = vpack.c.b16 %v110, %v108
    %v127 = vpack.c.b16 %v111, %v109
    %144 = vmatprep.subr.bf16.mxu0 %v127
    %145 = vmatpush1.bf16.msra.mxu0 %v126
    %146 = vmatprep.subr.bf16.mxu0 %v125
    %147 = vmatpush1.bf16.msra.mxu0 %v124
    %148 = vmatprep.subr.bf16.mxu0 %v123
    %149 = vmatpush1.bf16.msra.mxu0 %v122
    %150 = vmatprep.subr.bf16.mxu0 %v121
    %151 = vmatpush1.bf16.msra.mxu0 %v120
    %152 = vmatprep.subr.bf16.mxu0 %v119
    %153 = vmatpush1.bf16.msra.mxu0 %v118
    %154 = vmatprep.subr.bf16.mxu0 %v117
    %155 = vmatpush1.bf16.msra.mxu0 %v116
    %156 = vmatprep.subr.bf16.mxu0 %v115
    %157 = vmatpush1.bf16.msra.mxu0 %v114
    %158 = vmatprep.subr.bf16.mxu0 %v113
    %159 = vmatpush1.bf16.msra.mxu0 %v112
    %160 = vmatprep.subr.bf16.mxu0 0
    %161 = vmatpush2.bf16.msra.mxu0 0
    %162 = vmatprep.subr.bf16.mxu0 0
    %163 = vmatpush2.bf16.msra.mxu0 0
    %164 = vmatprep.subr.bf16.mxu0 0
    %165 = vmatpush2.bf16.msra.mxu0 0
    %166 = vmatprep.subr.bf16.mxu0 0
    %167 = vmatpush2.bf16.msra.mxu0 0
    %168 = vmatprep.subr.bf16.mxu0 0
    %169 = vmatpush2.bf16.msra.mxu0 0
    %170 = vmatprep.subr.bf16.mxu0 0
    %171 = vmatpush2.bf16.msra.mxu0 0
    %172 = vmatprep.subr.bf16.mxu0 0
    %173 = vmatpush2.bf16.msra.mxu0 0
    %174 = vmatprep.subr.bf16.mxu0 0
    %175 = vmatpush2.bf16.msra.mxu0 0
    %176 = vmatprep.mubr.bf16.mxu0 0
    %177 = vmatmul.mubr.bf16.gmra.mxu0 %v62
    %v178 = vpop.f32.mrf.mxu0
    %v179 = vadd.f32 %v51, %v178
    %v180 = vpop.f32.mrf.mxu0
    %v181 = vadd.f32 %v55, %v180
    %v182 = vpop.f32.mrf.mxu0
    %v183 = vadd.f32 %v51, %v182
    %v184 = vpop.f32.mrf.mxu0
    %v185 = vadd.f32 %v55, %v184
    %186 = vdwg.mxu0
    %v187 = vmax.f32 %v179, 0.0
    %v188 = vmax.f32 %v181, 0.0
    %v189 = vmax.f32 %v183, 0.0
    %v190 = vmax.f32 %v185, 0.0
    %v191 = vpack.c.bf16 %v189, %v187
    %v192 = vpack.c.bf16 %v190, %v188
    %v193 = vld [vmem:[%s3] sm:$0xff]
    %v194 = vld [vmem:[%s3 + $0x8] sm:$0xff]
    %v195 = vld [vmem:[%s3 + $0x10] sm:$0xff]
    %v196 = vld [vmem:[%s3 + $0x18] sm:$0xff]
    %v197 = vld [vmem:[%s3 + $0x20] sm:$0xff]
    %v198 = vld [vmem:[%s3 + $0x28] sm:$0xff]
    %v199 = vld [vmem:[%s3 + $0x30] sm:$0xff]
    %v200 = vld [vmem:[%s3 + $0x38] sm:$0xff]
    %v201 = vld [vmem:[%s3 + $0x40] sm:$0xff]
    %v202 = vld [vmem:[%s3 + $0x48] sm:$0xff]
    %v203 = vld [vmem:[%s3 + $0x50] sm:$0xff]
    %v204 = vld [vmem:[%s3 + $0x58] sm:$0xff]
    %v205 = vld [vmem:[%s3 + $0x60] sm:$0xff]
    %v206 = vld [vmem:[%s3 + $0x68] sm:$0xff]
    %v207 = vld [vmem:[%s3 + $0x70] sm:$0xff]
    %v208 = vld [vmem:[%s3 + $0x78] sm:$0xff]
    %v209 = vld [vmem:[%s3 + $0x80] sm:$0xff]
    %v210 = vld [vmem:[%s3 + $0x88] sm:$0xff]
    %v211 = vld [vmem:[%s3 + $0x90] sm:$0xff]
    %v212 = vld [vmem:[%s3 + $0x98] sm:$0xff]
    %v213 = vld [vmem:[%s3 + $0xa0] sm:$0xff]
    %v214 = vld [vmem:[%s3 + $0xa8] sm:$0xff]
    %v215 = vld [vmem:[%s3 + $0xb0] sm:$0xff]
    %v216 = vld [vmem:[%s3 + $0xb8] sm:$0xff]
    %v217 = vld [vmem:[%s3 + $0xc0] sm:$0xff]
    %v218 = vld [vmem:[%s3 + $0xc8] sm:$0xff]
    %v219 = vld [vmem:[%s3 + $0xd0] sm:$0xff]
    %v220 = vld [vmem:[%s3 + $0xd8] sm:$0xff]
    %v221 = vld [vmem:[%s3 + $0xe0] sm:$0xff]
    %v222 = vld [vmem:[%s3 + $0xe8] sm:$0xff]
    %v223 = vld [vmem:[%s3 + $0xf0] sm:$0xff]
    %v224 = vld [vmem:[%s3 + $0xf8] sm:$0xff]
    %v225 = vld [vmem:[%s3 + $0x100] sm:$0xff]
    %v226 = vld [vmem:[%s3 + $0x108] sm:$0xff]
    %v227 = vld [vmem:[%s3 + $0x110] sm:$0xff]
    %v228 = vld [vmem:[%s3 + $0x118] sm:$0xff]
    %v229 = vld [vmem:[%s3 + $0x120] sm:$0xff]
    %v230 = vld [vmem:[%s3 + $0x128] sm:$0xff]
    %v231 = vld [vmem:[%s3 + $0x130] sm:$0xff]
    %v232 = vld [vmem:[%s3 + $0x138] sm:$0xff]
    %v233 = vld [vmem:[%s3 + $0x140] sm:$0xff]
    %v234 = vld [vmem:[%s3 + $0x148] sm:$0xff]
    %v235 = vld [vmem:[%s3 + $0x150] sm:$0xff]
    %v236 = vld [vmem:[%s3 + $0x158] sm:$0xff]
    %v237 = vld [vmem:[%s3 + $0x160] sm:$0xff]
    %v238 = vld [vmem:[%s3 + $0x168] sm:$0xff]
    %v239 = vld [vmem:[%s3 + $0x170] sm:$0xff]
    %v240 = vld [vmem:[%s3 + $0x178] sm:$0xff]
    %v241 = vld [vmem:[%s3 + $0x180] sm:$0xff]
    %v242 = vld [vmem:[%s3 + $0x188] sm:$0xff]
    %v243 = vld [vmem:[%s3 + $0x190] sm:$0xff]
    %v244 = vld [vmem:[%s3 + $0x198] sm:$0xff]
    %v245 = vld [vmem:[%s3 + $0x1a0] sm:$0xff]
    %v246 = vld [vmem:[%s3 + $0x1a8] sm:$0xff]
    %v247 = vld [vmem:[%s3 + $0x1b0] sm:$0xff]
    %v248 = vld [vmem:[%s3 + $0x1b8] sm:$0xff]
    %v249 = vld [vmem:[%s3 + $0x1c0] sm:$0xff]
    %v250 = vld [vmem:[%s3 + $0x1c8] sm:$0xff]
    %v251 = vld [vmem:[%s3 + $0x1d0] sm:$0xff]
    %v252 = vld [vmem:[%s3 + $0x1d8] sm:$0xff]
    %v253 = vld [vmem:[%s3 + $0x1e0] sm:$0xff]
    %v254 = vld [vmem:[%s3 + $0x1e8] sm:$0xff]
    %v255 = vld [vmem:[%s3 + $0x1f0] sm:$0xff]
    %v256 = vld [vmem:[%s3 + $0x1f8] sm:$0xff]
    %v257 = vld [vmem:[%s4] sm:$0xf]
    %v259 = vlaneseq
    %v260 = vshrl.u32 %v259, 7
    %v261 = vsub.s32 0, %v260
    %v262 = vrot.slane %v257, %v261
    %v263 = vlaneseq
    %v264 = vshrl.u32 %v263, 7
    %v265 = vsub.s32 1, %v264
    %v266 = vrot.slane %v257, %v265
    %v267 = vlaneseq
    %v268 = vshrl.u32 %v267, 7
    %v269 = vsub.s32 2, %v268
    %v270 = vrot.slane %v257, %v269
    %v271 = vlaneseq
    %v272 = vshrl.u32 %v271, 7
    %v273 = vsub.s32 3, %v272
    %v274 = vrot.slane %v257, %v273
    %v343 = vunpack.c.l.b16 %v193
    %v344 = vunpack.c.h.b16 %v193
    %v345 = vunpack.c.l.b16 %v194
    %v346 = vunpack.c.h.b16 %v194
    %v347 = vunpack.c.l.b16 %v195
    %v348 = vunpack.c.h.b16 %v195
    %v349 = vunpack.c.l.b16 %v196
    %v350 = vunpack.c.h.b16 %v196
    %v351 = vunpack.c.l.b16 %v197
    %v352 = vunpack.c.h.b16 %v197
    %v353 = vunpack.c.l.b16 %v198
    %v354 = vunpack.c.h.b16 %v198
    %v355 = vunpack.c.l.b16 %v199
    %v356 = vunpack.c.h.b16 %v199
    %v357 = vunpack.c.l.b16 %v200
    %v358 = vunpack.c.h.b16 %v200
    %v359 = vunpack.c.l.b16 %v201
    %v360 = vunpack.c.h.b16 %v201
    %v361 = vunpack.c.l.b16 %v202
    %v362 = vunpack.c.h.b16 %v202
    %v363 = vunpack.c.l.b16 %v203
    %v364 = vunpack.c.h.b16 %v203
    %v365 = vunpack.c.l.b16 %v204
    %v366 = vunpack.c.h.b16 %v204
    %v367 = vunpack.c.l.b16 %v205
    %v368 = vunpack.c.h.b16 %v205
    %v369 = vunpack.c.l.b16 %v206
    %v370 = vunpack.c.h.b16 %v206
    %v371 = vunpack.c.l.b16 %v207
    %v372 = vunpack.c.h.b16 %v207
    %v373 = vunpack.c.l.b16 %v208
    %v374 = vunpack.c.h.b16 %v208
    %v375 = vunpack.c.l.b16 %v209
    %v376 = vunpack.c.h.b16 %v209
    %v377 = vunpack.c.l.b16 %v210
    %v378 = vunpack.c.h.b16 %v210
    %v379 = vunpack.c.l.b16 %v211
    %v380 = vunpack.c.h.b16 %v211
    %v381 = vunpack.c.l.b16 %v212
    %v382 = vunpack.c.h.b16 %v212
    %v383 = vunpack.c.l.b16 %v213
    %v384 = vunpack.c.h.b16 %v213
    %v385 = vunpack.c.l.b16 %v214
    %v386 = vunpack.c.h.b16 %v214
    %v387 = vunpack.c.l.b16 %v215
    %v388 = vunpack.c.h.b16 %v215
    %v389 = vunpack.c.l.b16 %v216
    %v390 = vunpack.c.h.b16 %v216
    %v391 = vunpack.c.l.b16 %v217
    %v392 = vunpack.c.h.b16 %v217
    %v393 = vunpack.c.l.b16 %v218
    %v394 = vunpack.c.h.b16 %v218
    %v395 = vunpack.c.l.b16 %v219
    %v396 = vunpack.c.h.b16 %v219
    %v397 = vunpack.c.l.b16 %v220
    %v398 = vunpack.c.h.b16 %v220
    %v399 = vunpack.c.l.b16 %v221
    %v400 = vunpack.c.h.b16 %v221
    %v401 = vunpack.c.l.b16 %v222
    %v402 = vunpack.c.h.b16 %v222
    %v403 = vunpack.c.l.b16 %v223
    %v404 = vunpack.c.h.b16 %v223
    %v405 = vunpack.c.l.b16 %v224
    %v406 = vunpack.c.h.b16 %v224
    %v407 = vunpack.c.l.b16 %v225
    %v408 = vunpack.c.h.b16 %v225
    %v409 = vunpack.c.l.b16 %v226
    %v410 = vunpack.c.h.b16 %v226
    %v411 = vunpack.c.l.b16 %v227
    %v412 = vunpack.c.h.b16 %v227
    %v413 = vunpack.c.l.b16 %v228
    %v414 = vunpack.c.h.b16 %v228
    %v415 = vunpack.c.l.b16 %v229
    %v416 = vunpack.c.h.b16 %v229
    %v417 = vunpack.c.l.b16 %v230
    %v418 = vunpack.c.h.b16 %v230
    %v419 = vunpack.c.l.b16 %v231
    %v420 = vunpack.c.h.b16 %v231
    %v421 = vunpack.c.l.b16 %v232
    %v422 = vunpack.c.h.b16 %v232
    %v423 = vunpack.c.l.b16 %v233
    %v424 = vunpack.c.h.b16 %v233
    %v425 = vunpack.c.l.b16 %v234
    %v426 = vunpack.c.h.b16 %v234
    %v427 = vunpack.c.l.b16 %v235
    %v428 = vunpack.c.h.b16 %v235
    %v429 = vunpack.c.l.b16 %v236
    %v430 = vunpack.c.h.b16 %v236
    %v431 = vunpack.c.l.b16 %v237
    %v432 = vunpack.c.h.b16 %v237
    %v433 = vunpack.c.l.b16 %v238
    %v434 = vunpack.c.h.b16 %v238
    %v435 = vunpack.c.l.b16 %v239
    %v436 = vunpack.c.h.b16 %v239
    %v437 = vunpack.c.l.b16 %v240
    %v438 = vunpack.c.h.b16 %v240
    %v439 = vunpack.c.l.b16 %v241
    %v440 = vunpack.c.h.b16 %v241
    %v441 = vunpack.c.l.b16 %v242
    %v442 = vunpack.c.h.b16 %v242
    %v443 = vunpack.c.l.b16 %v243
    %v444 = vunpack.c.h.b16 %v243
    %v445 = vunpack.c.l.b16 %v244
    %v446 = vunpack.c.h.b16 %v244
    %v447 = vunpack.c.l.b16 %v245
    %v448 = vunpack.c.h.b16 %v245
    %v449 = vunpack.c.l.b16 %v246
    %v450 = vunpack.c.h.b16 %v246
    %v451 = vunpack.c.l.b16 %v247
    %v452 = vunpack.c.h.b16 %v247
    %v453 = vunpack.c.l.b16 %v248
    %v454 = vunpack.c.h.b16 %v248
    %v455 = vunpack.c.l.b16 %v249
    %v456 = vunpack.c.h.b16 %v249
    %v457 = vunpack.c.l.b16 %v250
    %v458 = vunpack.c.h.b16 %v250
    %v459 = vunpack.c.l.b16 %v251
    %v460 = vunpack.c.h.b16 %v251
    %v461 = vunpack.c.l.b16 %v252
    %v462 = vunpack.c.h.b16 %v252
    %v463 = vunpack.c.l.b16 %v253
    %v464 = vunpack.c.h.b16 %v253
    %v465 = vunpack.c.l.b16 %v254
    %v466 = vunpack.c.h.b16 %v254
    %v467 = vunpack.c.l.b16 %v255
    %v468 = vunpack.c.h.b16 %v255
    %v469 = vunpack.c.l.b16 %v256
    %v470 = vunpack.c.h.b16 %v256
    %v471 = vpack.c.b16 %v347, %v343
    %v472 = vpack.c.b16 %v348, %v344
    %v473 = vpack.c.b16 %v349, %v345
    %v474 = vpack.c.b16 %v350, %v346
    %v475 = vpack.c.b16 %v355, %v351
    %v476 = vpack.c.b16 %v356, %v352
    %v477 = vpack.c.b16 %v357, %v353
    %v478 = vpack.c.b16 %v358, %v354
    %v479 = vpack.c.b16 %v363, %v359
    %v480 = vpack.c.b16 %v364, %v360
    %v481 = vpack.c.b16 %v365, %v361
    %v482 = vpack.c.b16 %v366, %v362
    %v483 = vpack.c.b16 %v371, %v367
    %v484 = vpack.c.b16 %v372, %v368
    %v485 = vpack.c.b16 %v373, %v369
    %v486 = vpack.c.b16 %v374, %v370
    %v487 = vpack.c.b16 %v379, %v375
    %v488 = vpack.c.b16 %v380, %v376
    %v489 = vpack.c.b16 %v381, %v377
    %v490 = vpack.c.b16 %v382, %v378
    %v491 = vpack.c.b16 %v387, %v383
    %v492 = vpack.c.b16 %v388, %v384
    %v493 = vpack.c.b16 %v389, %v385
    %v494 = vpack.c.b16 %v390, %v386
    %v495 = vpack.c.b16 %v395, %v391
    %v496 = vpack.c.b16 %v396, %v392
    %v497 = vpack.c.b16 %v397, %v393
    %v498 = vpack.c.b16 %v398, %v394
    %v499 = vpack.c.b16 %v403, %v399
    %v500 = vpack.c.b16 %v404, %v400
    %v501 = vpack.c.b16 %v405, %v401
    %v502 = vpack.c.b16 %v406, %v402
    %v503 = vpack.c.b16 %v411, %v407
    %v504 = vpack.c.b16 %v412, %v408
    %v505 = vpack.c.b16 %v413, %v409
    %v506 = vpack.c.b16 %v414, %v410
    %v507 = vpack.c.b16 %v419, %v415
    %v508 = vpack.c.b16 %v420, %v416
    %v509 = vpack.c.b16 %v421, %v417
    %v510 = vpack.c.b16 %v422, %v418
    %v511 = vpack.c.b16 %v427, %v423
    %v512 = vpack.c.b16 %v428, %v424
    %v513 = vpack.c.b16 %v429, %v425
    %v514 = vpack.c.b16 %v430, %v426
    %v515 = vpack.c.b16 %v435, %v431
    %v516 = vpack.c.b16 %v436, %v432
    %v517 = vpack.c.b16 %v437, %v433
    %v518 = vpack.c.b16 %v438, %v434
    %v519 = vpack.c.b16 %v443, %v439
    %v520 = vpack.c.b16 %v444, %v440
    %v521 = vpack.c.b16 %v445, %v441
    %v522 = vpack.c.b16 %v446, %v442
    %v523 = vpack.c.b16 %v451, %v447
    %v524 = vpack.c.b16 %v452, %v448
    %v525 = vpack.c.b16 %v453, %v449
    %v526 = vpack.c.b16 %v454, %v450
    %v527 = vpack.c.b16 %v459, %v455
    %v528 = vpack.c.b16 %v460, %v456
    %v529 = vpack.c.b16 %v461, %v457
    %v530 = vpack.c.b16 %v462, %v458
    %v531 = vpack.c.b16 %v467, %v463
    %v532 = vpack.c.b16 %v468, %v464
    %v533 = vpack.c.b16 %v469, %v465
    %v534 = vpack.c.b16 %v470, %v466
    %599 = vmatprep.subr.bf16.mxu0 %v500
    %600 = vmatpush1.bf16.msra.mxu0 %v499
    %601 = vmatprep.subr.bf16.mxu0 %v496
    %602 = vmatpush1.bf16.msra.mxu0 %v495
    %603 = vmatprep.subr.bf16.mxu0 %v492
    %604 = vmatpush1.bf16.msra.mxu0 %v491
    %605 = vmatprep.subr.bf16.mxu0 %v488
    %606 = vmatpush1.bf16.msra.mxu0 %v487
    %607 = vmatprep.subr.bf16.mxu0 %v484
    %608 = vmatpush1.bf16.msra.mxu0 %v483
    %609 = vmatprep.subr.bf16.mxu0 %v480
    %610 = vmatpush1.bf16.msra.mxu0 %v479
    %611 = vmatprep.subr.bf16.mxu0 %v476
    %612 = vmatpush1.bf16.msra.mxu0 %v475
    %613 = vmatprep.subr.bf16.mxu0 %v472
    %614 = vmatpush1.bf16.msra.mxu0 %v471
    %615 = vmatprep.subr.bf16.mxu0 %v532
    %616 = vmatpush2.bf16.msra.mxu0 %v531
    %617 = vmatprep.subr.bf16.mxu0 %v528
    %618 = vmatpush2.bf16.msra.mxu0 %v527
    %619 = vmatprep.subr.bf16.mxu0 %v524
    %620 = vmatpush2.bf16.msra.mxu0 %v523
    %621 = vmatprep.subr.bf16.mxu0 %v520
    %622 = vmatpush2.bf16.msra.mxu0 %v519
    %623 = vmatprep.subr.bf16.mxu0 %v516
    %624 = vmatpush2.bf16.msra.mxu0 %v515
    %625 = vmatprep.subr.bf16.mxu0 %v512
    %626 = vmatpush2.bf16.msra.mxu0 %v511
    %627 = vmatprep.subr.bf16.mxu0 %v508
    %628 = vmatpush2.bf16.msra.mxu0 %v507
    %629 = vmatprep.subr.bf16.mxu0 %v504
    %630 = vmatpush2.bf16.msra.mxu0 %v503
    %631 = vmatprep.mubr.bf16.mxu0 %v192
    %632 = vmatmul.mubr.bf16.gmra.mxu0 %v191
    %v633 = vpop.f32.mrf.mxu0
    %v634 = vadd.f32 %v262, %v633
    %v635 = vpop.f32.mrf.mxu0
    %v636 = vadd.f32 %v266, %v635
    %v637 = vpop.f32.mrf.mxu0
    %v638 = vadd.f32 %v262, %v637
    %v639 = vpop.f32.mrf.mxu0
    %v640 = vadd.f32 %v266, %v639
    %641 = vdwg.mxu0
    %642 = vmatprep.subr.bf16.mxu0 %v502
    %643 = vmatpush1.bf16.msra.mxu0 %v501
    %644 = vmatprep.subr.bf16.mxu0 %v498
    %645 = vmatpush1.bf16.msra.mxu0 %v497
    %646 = vmatprep.subr.bf16.mxu0 %v494
    %647 = vmatpush1.bf16.msra.mxu0 %v493
    %648 = vmatprep.subr.bf16.mxu0 %v490
    %649 = vmatpush1.bf16.msra.mxu0 %v489
    %650 = vmatprep.subr.bf16.mxu0 %v486
    %651 = vmatpush1.bf16.msra.mxu0 %v485
    %652 = vmatprep.subr.bf16.mxu0 %v482
    %653 = vmatpush1.bf16.msra.mxu0 %v481
    %654 = vmatprep.subr.bf16.mxu0 %v478
    %655 = vmatpush1.bf16.msra.mxu0 %v477
    %656 = vmatprep.subr.bf16.mxu0 %v474
    %657 = vmatpush1.bf16.msra.mxu0 %v473
    %658 = vmatprep.subr.bf16.mxu0 %v534
    %659 = vmatpush2.bf16.msra.mxu0 %v533
    %660 = vmatprep.subr.bf16.mxu0 %v530
    %661 = vmatpush2.bf16.msra.mxu0 %v529
    %662 = vmatprep.subr.bf16.mxu0 %v526
    %663 = vmatpush2.bf16.msra.mxu0 %v525
    %664 = vmatprep.subr.bf16.mxu0 %v522
    %665 = vmatpush2.bf16.msra.mxu0 %v521
    %666 = vmatprep.subr.bf16.mxu0 %v518
    %667 = vmatpush2.bf16.msra.mxu0 %v517
    %668 = vmatprep.subr.bf16.mxu0 %v514
    %669 = vmatpush2.bf16.msra.mxu0 %v513
    %670 = vmatprep.subr.bf16.mxu0 %v510
    %671 = vmatpush2.bf16.msra.mxu0 %v509
    %672 = vmatprep.subr.bf16.mxu0 %v506
    %673 = vmatpush2.bf16.msra.mxu0 %v505
    %674 = vmatprep.mubr.bf16.mxu0 %v192
    %675 = vmatmul.mubr.bf16.gmra.mxu0 %v191
    %v676 = vpop.f32.mrf.mxu0
    %v677 = vadd.f32 %v270, %v676
    %v678 = vpop.f32.mrf.mxu0
    %v679 = vadd.f32 %v274, %v678
    %v680 = vpop.f32.mrf.mxu0
    %v681 = vadd.f32 %v270, %v680
    %v682 = vpop.f32.mrf.mxu0
    %v683 = vadd.f32 %v274, %v682
    %684 = vdwg.mxu0
    %v685 = vmax.f32 %v634, 0.0
    %v686 = vmax.f32 %v636, 0.0
    %v687 = vmax.f32 %v677, 0.0
    %v688 = vmax.f32 %v679, 0.0
    %v689 = vmax.f32 %v638, 0.0
    %v690 = vmax.f32 %v640, 0.0
    %v691 = vmax.f32 %v681, 0.0
    %v692 = vmax.f32 %v683, 0.0
    %v693 = vpack.c.bf16 %v689, %v685
    %v694 = vpack.c.bf16 %v690, %v686
    %v695 = vpack.c.bf16 %v691, %v687
    %v696 = vpack.c.bf16 %v692, %v688
    %v697 = vld [vmem:[%s5] sm:$0xff]
    %v698 = vld [vmem:[%s5 + $0x8] sm:$0xff]
    %v699 = vld [vmem:[%s5 + $0x10] sm:$0xff]
    %v700 = vld [vmem:[%s5 + $0x18] sm:$0xf]
    %v701 = vld [vmem:[%s5 + $0x1c] sm:$0xff]
    %v702 = vld [vmem:[%s5 + $0x24] sm:$0xff]
    %v703 = vld [vmem:[%s5 + $0x2c] sm:$0xff]
    %v704 = vld [vmem:[%s5 + $0x34] sm:$0xf]
    %v705 = vld [vmem:[%s5 + $0x38] sm:$0xff]
    %v706 = vld [vmem:[%s5 + $0x40] sm:$0xff]
    %v707 = vld [vmem:[%s5 + $0x48] sm:$0xff]
    %v708 = vld [vmem:[%s5 + $0x50] sm:$0xf]
    %v709 = vld [vmem:[%s5 + $0x54] sm:$0xff]
    %v710 = vld [vmem:[%s5 + $0x5c] sm:$0xff]
    %v711 = vld [vmem:[%s5 + $0x64] sm:$0xff]
    %v712 = vld [vmem:[%s5 + $0x6c] sm:$0xf]
    %v713 = vld [vmem:[%s5 + $0x70] sm:$0xff]
    %v714 = vld [vmem:[%s5 + $0x78] sm:$0xff]
    %v715 = vld [vmem:[%s5 + $0x80] sm:$0xff]
    %v716 = vld [vmem:[%s5 + $0x88] sm:$0xf]
    %v717 = vld [vmem:[%s5 + $0x8c] sm:$0xff]
    %v718 = vld [vmem:[%s5 + $0x94] sm:$0xff]
    %v719 = vld [vmem:[%s5 + $0x9c] sm:$0xff]
    %v720 = vld [vmem:[%s5 + $0xa4] sm:$0xf]
    %v721 = vld [vmem:[%s5 + $0xa8] sm:$0xff]
    %v722 = vld [vmem:[%s5 + $0xb0] sm:$0xff]
    %v723 = vld [vmem:[%s5 + $0xb8] sm:$0xff]
    %v724 = vld [vmem:[%s5 + $0xc0] sm:$0xf]
    %v725 = vld [vmem:[%s5 + $0xc4] sm:$0xff]
    %v726 = vld [vmem:[%s5 + $0xcc] sm:$0xff]
    %v727 = vld [vmem:[%s5 + $0xd4] sm:$0xff]
    %v728 = vld [vmem:[%s5 + $0xdc] sm:$0xf]
    %v729 = vld [vmem:[%s5 + $0xe0] sm:$0xff]
    %v730 = vld [vmem:[%s5 + $0xe8] sm:$0xff]
    %v731 = vld [vmem:[%s5 + $0xf0] sm:$0xff]
    %v732 = vld [vmem:[%s5 + $0xf8] sm:$0xf]
    %v733 = vld [vmem:[%s5 + $0xfc] sm:$0xff]
    %v734 = vld [vmem:[%s5 + $0x104] sm:$0xff]
    %v735 = vld [vmem:[%s5 + $0x10c] sm:$0xff]
    %v736 = vld [vmem:[%s5 + $0x114] sm:$0xf]
    %v737 = vld [vmem:[%s5 + $0x118] sm:$0xff]
    %v738 = vld [vmem:[%s5 + $0x120] sm:$0xff]
    %v739 = vld [vmem:[%s5 + $0x128] sm:$0xff]
    %v740 = vld [vmem:[%s5 + $0x130] sm:$0xf]
    %v741 = vld [vmem:[%s5 + $0x134] sm:$0xff]
    %v742 = vld [vmem:[%s5 + $0x13c] sm:$0xff]
    %v743 = vld [vmem:[%s5 + $0x144] sm:$0xff]
    %v744 = vld [vmem:[%s5 + $0x14c] sm:$0xf]
    %v745 = vld [vmem:[%s5 + $0x150] sm:$0xff]
    %v746 = vld [vmem:[%s5 + $0x158] sm:$0xff]
    %v747 = vld [vmem:[%s5 + $0x160] sm:$0xff]
    %v748 = vld [vmem:[%s5 + $0x168] sm:$0xf]
    %v749 = vld [vmem:[%s5 + $0x16c] sm:$0xff]
    %v750 = vld [vmem:[%s5 + $0x174] sm:$0xff]
    %v751 = vld [vmem:[%s5 + $0x17c] sm:$0xff]
    %v752 = vld [vmem:[%s5 + $0x184] sm:$0xf]
    %v753 = vld [vmem:[%s5 + $0x188] sm:$0xff]
    %v754 = vld [vmem:[%s5 + $0x190] sm:$0xff]
    %v755 = vld [vmem:[%s5 + $0x198] sm:$0xff]
    %v756 = vld [vmem:[%s5 + $0x1a0] sm:$0xf]
    %v757 = vld [vmem:[%s5 + $0x1a4] sm:$0xff]
    %v758 = vld [vmem:[%s5 + $0x1ac] sm:$0xff]
    %v759 = vld [vmem:[%s5 + $0x1b4] sm:$0xff]
    %v760 = vld [vmem:[%s5 + $0x1bc] sm:$0xf]
    %v761 = vld [vmem:[%s5 + $0x1c0] sm:$0xff]
    %v762 = vld [vmem:[%s5 + $0x1c8] sm:$0xff]
    %v763 = vld [vmem:[%s5 + $0x1d0] sm:$0xff]
    %v764 = vld [vmem:[%s5 + $0x1d8] sm:$0xf]
    %v765 = vld [vmem:[%s5 + $0x1dc] sm:$0xff]
    %v766 = vld [vmem:[%s5 + $0x1e4] sm:$0xff]
    %v767 = vld [vmem:[%s5 + $0x1ec] sm:$0xff]
    %v768 = vld [vmem:[%s5 + $0x1f4] sm:$0xf]
    %v769 = vld [vmem:[%s5 + $0x1f8] sm:$0xff]
    %v770 = vld [vmem:[%s5 + $0x200] sm:$0xff]
    %v771 = vld [vmem:[%s5 + $0x208] sm:$0xff]
    %v772 = vld [vmem:[%s5 + $0x210] sm:$0xf]
    %v773 = vld [vmem:[%s5 + $0x214] sm:$0xff]
    %v774 = vld [vmem:[%s5 + $0x21c] sm:$0xff]
    %v775 = vld [vmem:[%s5 + $0x224] sm:$0xff]
    %v776 = vld [vmem:[%s5 + $0x22c] sm:$0xf]
    %v777 = vld [vmem:[%s5 + $0x230] sm:$0xff]
    %v778 = vld [vmem:[%s5 + $0x238] sm:$0xff]
    %v779 = vld [vmem:[%s5 + $0x240] sm:$0xff]
    %v780 = vld [vmem:[%s5 + $0x248] sm:$0xf]
    %v781 = vld [vmem:[%s5 + $0x24c] sm:$0xff]
    %v782 = vld [vmem:[%s5 + $0x254] sm:$0xff]
    %v783 = vld [vmem:[%s5 + $0x25c] sm:$0xff]
    %v784 = vld [vmem:[%s5 + $0x264] sm:$0xf]
    %v785 = vld [vmem:[%s5 + $0x268] sm:$0xff]
    %v786 = vld [vmem:[%s5 + $0x270] sm:$0xff]
    %v787 = vld [vmem:[%s5 + $0x278] sm:$0xff]
    %v788 = vld [vmem:[%s5 + $0x280] sm:$0xf]
    %v789 = vld [vmem:[%s5 + $0x284] sm:$0xff]
    %v790 = vld [vmem:[%s5 + $0x28c] sm:$0xff]
    %v791 = vld [vmem:[%s5 + $0x294] sm:$0xff]
    %v792 = vld [vmem:[%s5 + $0x29c] sm:$0xf]
    %v793 = vld [vmem:[%s5 + $0x2a0] sm:$0xff]
    %v794 = vld [vmem:[%s5 + $0x2a8] sm:$0xff]
    %v795 = vld [vmem:[%s5 + $0x2b0] sm:$0xff]
    %v796 = vld [vmem:[%s5 + $0x2b8] sm:$0xf]
    %v797 = vld [vmem:[%s5 + $0x2bc] sm:$0xff]
    %v798 = vld [vmem:[%s5 + $0x2c4] sm:$0xff]
    %v799 = vld [vmem:[%s5 + $0x2cc] sm:$0xff]
    %v800 = vld [vmem:[%s5 + $0x2d4] sm:$0xf]
    %v801 = vld [vmem:[%s5 + $0x2d8] sm:$0xff]
    %v802 = vld [vmem:[%s5 + $0x2e0] sm:$0xff]
    %v803 = vld [vmem:[%s5 + $0x2e8] sm:$0xff]
    %v804 = vld [vmem:[%s5 + $0x2f0] sm:$0xf]
    %v805 = vld [vmem:[%s5 + $0x2f4] sm:$0xff]
    %v806 = vld [vmem:[%s5 + $0x2fc] sm:$0xff]
    %v807 = vld [vmem:[%s5 + $0x304] sm:$0xff]
    %v808 = vld [vmem:[%s5 + $0x30c] sm:$0xf]
    %v809 = vld [vmem:[%s5 + $0x310] sm:$0xff]
    %v810 = vld [vmem:[%s5 + $0x318] sm:$0xff]
    %v811 = vld [vmem:[%s5 + $0x320] sm:$0xff]
    %v812 = vld [vmem:[%s5 + $0x328] sm:$0xf]
    %v813 = vld [vmem:[%s5 + $0x32c] sm:$0xff]
    %v814 = vld [vmem:[%s5 + $0x334] sm:$0xff]
    %v815 = vld [vmem:[%s5 + $0x33c] sm:$0xff]
    %v816 = vld [vmem:[%s5 + $0x344] sm:$0xf]
    %v817 = vld [vmem:[%s5 + $0x348] sm:$0xff]
    %v818 = vld [vmem:[%s5 + $0x350] sm:$0xff]
    %v819 = vld [vmem:[%s5 + $0x358] sm:$0xff]
    %v820 = vld [vmem:[%s5 + $0x360] sm:$0xf]
    %v821 = vld [vmem:[%s5 + $0x364] sm:$0xff]
    %v822 = vld [vmem:[%s5 + $0x36c] sm:$0xff]
    %v823 = vld [vmem:[%s5 + $0x374] sm:$0xff]
    %v824 = vld [vmem:[%s5 + $0x37c] sm:$0xf]
    %v825 = vld [vmem:[%s5 + $0x380] sm:$0xff]
    %v826 = vld [vmem:[%s5 + $0x388] sm:$0xff]
    %v827 = vld [vmem:[%s5 + $0x390] sm:$0xff]
    %v828 = vld [vmem:[%s5 + $0x398] sm:$0xf]
    %v829 = vld [vmem:[%s5 + $0x39c] sm:$0xff]
    %v830 = vld [vmem:[%s5 + $0x3a4] sm:$0xff]
    %v831 = vld [vmem:[%s5 + $0x3ac] sm:$0xff]
    %v832 = vld [vmem:[%s5 + $0x3b4] sm:$0xf]
    %v833 = vld [vmem:[%s5 + $0x3b8] sm:$0xff]
    %v834 = vld [vmem:[%s5 + $0x3c0] sm:$0xff]
    %v835 = vld [vmem:[%s5 + $0x3c8] sm:$0xff]
    %v836 = vld [vmem:[%s5 + $0x3d0] sm:$0xf]
    %v837 = vld [vmem:[%s5 + $0x3d4] sm:$0xff]
    %v838 = vld [vmem:[%s5 + $0x3dc] sm:$0xff]
    %v839 = vld [vmem:[%s5 + $0x3e4] sm:$0xff]
    %v840 = vld [vmem:[%s5 + $0x3ec] sm:$0xf]
    %v841 = vld [vmem:[%s5 + $0x3f0] sm:$0xff]
    %v842 = vld [vmem:[%s5 + $0x3f8] sm:$0xff]
    %v843 = vld [vmem:[%s5 + $0x400] sm:$0xff]
    %v844 = vld [vmem:[%s5 + $0x408] sm:$0xf]
    %v845 = vld [vmem:[%s5 + $0x40c] sm:$0xff]
    %v846 = vld [vmem:[%s5 + $0x414] sm:$0xff]
    %v847 = vld [vmem:[%s5 + $0x41c] sm:$0xff]
    %v848 = vld [vmem:[%s5 + $0x424] sm:$0xf]
    %v849 = vld [vmem:[%s5 + $0x428] sm:$0xff]
    %v850 = vld [vmem:[%s5 + $0x430] sm:$0xff]
    %v851 = vld [vmem:[%s5 + $0x438] sm:$0xff]
    %v852 = vld [vmem:[%s5 + $0x440] sm:$0xf]
    %v853 = vld [vmem:[%s5 + $0x444] sm:$0xff]
    %v854 = vld [vmem:[%s5 + $0x44c] sm:$0xff]
    %v855 = vld [vmem:[%s5 + $0x454] sm:$0xff]
    %v856 = vld [vmem:[%s5 + $0x45c] sm:$0xf]
    %v857 = vld [vmem:[%s5 + $0x460] sm:$0xff]
    %v858 = vld [vmem:[%s5 + $0x468] sm:$0xff]
    %v859 = vld [vmem:[%s5 + $0x470] sm:$0xff]
    %v860 = vld [vmem:[%s5 + $0x478] sm:$0xf]
    %v861 = vld [vmem:[%s5 + $0x47c] sm:$0xff]
    %v862 = vld [vmem:[%s5 + $0x484] sm:$0xff]
    %v863 = vld [vmem:[%s5 + $0x48c] sm:$0xff]
    %v864 = vld [vmem:[%s5 + $0x494] sm:$0xf]
    %v865 = vld [vmem:[%s5 + $0x498] sm:$0xff]
    %v866 = vld [vmem:[%s5 + $0x4a0] sm:$0xff]
    %v867 = vld [vmem:[%s5 + $0x4a8] sm:$0xff]
    %v868 = vld [vmem:[%s5 + $0x4b0] sm:$0xf]
    %v869 = vld [vmem:[%s5 + $0x4b4] sm:$0xff]
    %v870 = vld [vmem:[%s5 + $0x4bc] sm:$0xff]
    %v871 = vld [vmem:[%s5 + $0x4c4] sm:$0xff]
    %v872 = vld [vmem:[%s5 + $0x4cc] sm:$0xf]
    %v873 = vld [vmem:[%s5 + $0x4d0] sm:$0xff]
    %v874 = vld [vmem:[%s5 + $0x4d8] sm:$0xff]
    %v875 = vld [vmem:[%s5 + $0x4e0] sm:$0xff]
    %v876 = vld [vmem:[%s5 + $0x4e8] sm:$0xf]
    %v877 = vld [vmem:[%s5 + $0x4ec] sm:$0xff]
    %v878 = vld [vmem:[%s5 + $0x4f4] sm:$0xff]
    %v879 = vld [vmem:[%s5 + $0x4fc] sm:$0xff]
    %v880 = vld [vmem:[%s5 + $0x504] sm:$0xf]
    %v881 = vld [vmem:[%s5 + $0x508] sm:$0xff]
    %v882 = vld [vmem:[%s5 + $0x510] sm:$0xff]
    %v883 = vld [vmem:[%s5 + $0x518] sm:$0xff]
    %v884 = vld [vmem:[%s5 + $0x520] sm:$0xf]
    %v885 = vld [vmem:[%s5 + $0x524] sm:$0xff]
    %v886 = vld [vmem:[%s5 + $0x52c] sm:$0xff]
    %v887 = vld [vmem:[%s5 + $0x534] sm:$0xff]
    %v888 = vld [vmem:[%s5 + $0x53c] sm:$0xf]
    %v889 = vld [vmem:[%s5 + $0x540] sm:$0xff]
    %v890 = vld [vmem:[%s5 + $0x548] sm:$0xff]
    %v891 = vld [vmem:[%s5 + $0x550] sm:$0xff]
    %v892 = vld [vmem:[%s5 + $0x558] sm:$0xf]
    %v893 = vld [vmem:[%s5 + $0x55c] sm:$0xff]
    %v894 = vld [vmem:[%s5 + $0x564] sm:$0xff]
    %v895 = vld [vmem:[%s5 + $0x56c] sm:$0xff]
    %v896 = vld [vmem:[%s5 + $0x574] sm:$0xf]
    %v897 = vld [vmem:[%s5 + $0x578] sm:$0xff]
    %v898 = vld [vmem:[%s5 + $0x580] sm:$0xff]
    %v899 = vld [vmem:[%s5 + $0x588] sm:$0xff]
    %v900 = vld [vmem:[%s5 + $0x590] sm:$0xf]
    %v901 = vld [vmem:[%s5 + $0x594] sm:$0xff]
    %v902 = vld [vmem:[%s5 + $0x59c] sm:$0xff]
    %v903 = vld [vmem:[%s5 + $0x5a4] sm:$0xff]
    %v904 = vld [vmem:[%s5 + $0x5ac] sm:$0xf]
    %v905 = vld [vmem:[%s5 + $0x5b0] sm:$0xff]
    %v906 = vld [vmem:[%s5 + $0x5b8] sm:$0xff]
    %v907 = vld [vmem:[%s5 + $0x5c0] sm:$0xff]
    %v908 = vld [vmem:[%s5 + $0x5c8] sm:$0xf]
    %v909 = vld [vmem:[%s5 + $0x5cc] sm:$0xff]
    %v910 = vld [vmem:[%s5 + $0x5d4] sm:$0xff]
    %v911 = vld [vmem:[%s5 + $0x5dc] sm:$0xff]
    %v912 = vld [vmem:[%s5 + $0x5e4] sm:$0xf]
    %v913 = vld [vmem:[%s5 + $0x5e8] sm:$0xff]
    %v914 = vld [vmem:[%s5 + $0x5f0] sm:$0xff]
    %v915 = vld [vmem:[%s5 + $0x5f8] sm:$0xff]
    %v916 = vld [vmem:[%s5 + $0x600] sm:$0xf]
    %v917 = vld [vmem:[%s5 + $0x604] sm:$0xff]
    %v918 = vld [vmem:[%s5 + $0x60c] sm:$0xff]
    %v919 = vld [vmem:[%s5 + $0x614] sm:$0xff]
    %v920 = vld [vmem:[%s5 + $0x61c] sm:$0xf]
    %v921 = vld [vmem:[%s5 + $0x620] sm:$0xff]
    %v922 = vld [vmem:[%s5 + $0x628] sm:$0xff]
    %v923 = vld [vmem:[%s5 + $0x630] sm:$0xff]
    %v924 = vld [vmem:[%s5 + $0x638] sm:$0xf]
    %v925 = vld [vmem:[%s5 + $0x63c] sm:$0xff]
    %v926 = vld [vmem:[%s5 + $0x644] sm:$0xff]
    %v927 = vld [vmem:[%s5 + $0x64c] sm:$0xff]
    %v928 = vld [vmem:[%s5 + $0x654] sm:$0xf]
    %v929 = vld [vmem:[%s5 + $0x658] sm:$0xff]
    %v930 = vld [vmem:[%s5 + $0x660] sm:$0xff]
    %v931 = vld [vmem:[%s5 + $0x668] sm:$0xff]
    %v932 = vld [vmem:[%s5 + $0x670] sm:$0xf]
    %v933 = vld [vmem:[%s5 + $0x674] sm:$0xff]
    %v934 = vld [vmem:[%s5 + $0x67c] sm:$0xff]
    %v935 = vld [vmem:[%s5 + $0x684] sm:$0xff]
    %v936 = vld [vmem:[%s5 + $0x68c] sm:$0xf]
    %v937 = vld [vmem:[%s5 + $0x690] sm:$0xff]
    %v938 = vld [vmem:[%s5 + $0x698] sm:$0xff]
    %v939 = vld [vmem:[%s5 + $0x6a0] sm:$0xff]
    %v940 = vld [vmem:[%s5 + $0x6a8] sm:$0xf]
    %v941 = vld [vmem:[%s5 + $0x6ac] sm:$0xff]
    %v942 = vld [vmem:[%s5 + $0x6b4] sm:$0xff]
    %v943 = vld [vmem:[%s5 + $0x6bc] sm:$0xff]
    %v944 = vld [vmem:[%s5 + $0x6c4] sm:$0xf]
    %v945 = vld [vmem:[%s5 + $0x6c8] sm:$0xff]
    %v946 = vld [vmem:[%s5 + $0x6d0] sm:$0xff]
    %v947 = vld [vmem:[%s5 + $0x6d8] sm:$0xff]
    %v948 = vld [vmem:[%s5 + $0x6e0] sm:$0xf]
    %v949 = vld [vmem:[%s5 + $0x6e4] sm:$0xff]
    %v950 = vld [vmem:[%s5 + $0x6ec] sm:$0xff]
    %v951 = vld [vmem:[%s5 + $0x6f4] sm:$0xff]
    %v952 = vld [vmem:[%s5 + $0x6fc] sm:$0xf]
    %v953 = vld [vmem:[%s6] sm:$0x7f]
    %v955 = vlaneseq
    %v956 = vshrl.u32 %v955, 7
    %v957 = vsub.s32 0, %v956
    %v958 = vrot.slane %v953, %v957
    %v959 = vlaneseq
    %v960 = vshrl.u32 %v959, 7
    %v961 = vsub.s32 1, %v960
    %v962 = vrot.slane %v953, %v961
    %v963 = vlaneseq
    %v964 = vshrl.u32 %v963, 7
    %v965 = vsub.s32 2, %v964
    %v966 = vrot.slane %v953, %v965
    %v967 = vlaneseq
    %v968 = vshrl.u32 %v967, 7
    %v969 = vsub.s32 3, %v968
    %v970 = vrot.slane %v953, %v969
    %v971 = vlaneseq
    %v972 = vshrl.u32 %v971, 7
    %v973 = vsub.s32 4, %v972
    %v974 = vrot.slane %v953, %v973
    %v975 = vlaneseq
    %v976 = vshrl.u32 %v975, 7
    %v977 = vsub.s32 5, %v976
    %v978 = vrot.slane %v953, %v977
    %v979 = vlaneseq
    %v980 = vshrl.u32 %v979, 7
    %v981 = vsub.s32 6, %v980
    %v982 = vrot.slane %v953, %v981
    %v1246 = vunpack.c.l.b16 %v697
    %v1247 = vunpack.c.h.b16 %v697
    %v1248 = vunpack.c.l.b16 %v698
    %v1249 = vunpack.c.h.b16 %v698
    %v1250 = vunpack.c.l.b16 %v699
    %v1251 = vunpack.c.h.b16 %v699
    %v1252 = vunpack.c.l.b16 %v700
    %v1253 = vunpack.c.l.b16 %v701
    %v1254 = vunpack.c.h.b16 %v701
    %v1255 = vunpack.c.l.b16 %v702
    %v1256 = vunpack.c.h.b16 %v702
    %v1257 = vunpack.c.l.b16 %v703
    %v1258 = vunpack.c.h.b16 %v703
    %v1259 = vunpack.c.l.b16 %v704
    %v1260 = vunpack.c.l.b16 %v705
    %v1261 = vunpack.c.h.b16 %v705
    %v1262 = vunpack.c.l.b16 %v706
    %v1263 = vunpack.c.h.b16 %v706
    %v1264 = vunpack.c.l.b16 %v707
    %v1265 = vunpack.c.h.b16 %v707
    %v1266 = vunpack.c.l.b16 %v708
    %v1267 = vunpack.c.l.b16 %v709
    %v1268 = vunpack.c.h.b16 %v709
    %v1269 = vunpack.c.l.b16 %v710
    %v1270 = vunpack.c.h.b16 %v710
    %v1271 = vunpack.c.l.b16 %v711
    %v1272 = vunpack.c.h.b16 %v711
    %v1273 = vunpack.c.l.b16 %v712
    %v1274 = vunpack.c.l.b16 %v713
    %v1275 = vunpack.c.h.b16 %v713
    %v1276 = vunpack.c.l.b16 %v714
    %v1277 = vunpack.c.h.b16 %v714
    %v1278 = vunpack.c.l.b16 %v715
    %v1279 = vunpack.c.h.b16 %v715
    %v1280 = vunpack.c.l.b16 %v716
    %v1281 = vunpack.c.l.b16 %v717
    %v1282 = vunpack.c.h.b16 %v717
    %v1283 = vunpack.c.l.b16 %v718
    %v1284 = vunpack.c.h.b16 %v718
    %v1285 = vunpack.c.l.b16 %v719
    %v1286 = vunpack.c.h.b16 %v719
    %v1287 = vunpack.c.l.b16 %v720
    %v1288 = vunpack.c.l.b16 %v721
    %v1289 = vunpack.c.h.b16 %v721
    %v1290 = vunpack.c.l.b16 %v722
    %v1291 = vunpack.c.h.b16 %v722
    %v1292 = vunpack.c.l.b16 %v723
    %v1293 = vunpack.c.h.b16 %v723
    %v1294 = vunpack.c.l.b16 %v724
    %v1295 = vunpack.c.l.b16 %v725
    %v1296 = vunpack.c.h.b16 %v725
    %v1297 = vunpack.c.l.b16 %v726
    %v1298 = vunpack.c.h.b16 %v726
    %v1299 = vunpack.c.l.b16 %v727
    %v1300 = vunpack.c.h.b16 %v727
    %v1301 = vunpack.c.l.b16 %v728
    %v1302 = vunpack.c.l.b16 %v729
    %v1303 = vunpack.c.h.b16 %v729
    %v1304 = vunpack.c.l.b16 %v730
    %v1305 = vunpack.c.h.b16 %v730
    %v1306 = vunpack.c.l.b16 %v731
    %v1307 = vunpack.c.h.b16 %v731
    %v1308 = vunpack.c.l.b16 %v732
    %v1309 = vunpack.c.l.b16 %v733
    %v1310 = vunpack.c.h.b16 %v733
    %v1311 = vunpack.c.l.b16 %v734
    %v1312 = vunpack.c.h.b16 %v734
    %v1313 = vunpack.c.l.b16 %v735
    %v1314 = vunpack.c.h.b16 %v735
    %v1315 = vunpack.c.l.b16 %v736
    %v1316 = vunpack.c.l.b16 %v737
    %v1317 = vunpack.c.h.b16 %v737
    %v1318 = vunpack.c.l.b16 %v738
    %v1319 = vunpack.c.h.b16 %v738
    %v1320 = vunpack.c.l.b16 %v739
    %v1321 = vunpack.c.h.b16 %v739
    %v1322 = vunpack.c.l.b16 %v740
    %v1323 = vunpack.c.l.b16 %v741
    %v1324 = vunpack.c.h.b16 %v741
    %v1325 = vunpack.c.l.b16 %v742
    %v1326 = vunpack.c.h.b16 %v742
    %v1327 = vunpack.c.l.b16 %v743
    %v1328 = vunpack.c.h.b16 %v743
    %v1329 = vunpack.c.l.b16 %v744
    %v1330 = vunpack.c.l.b16 %v745
    %v1331 = vunpack.c.h.b16 %v745
    %v1332 = vunpack.c.l.b16 %v746
    %v1333 = vunpack.c.h.b16 %v746
    %v1334 = vunpack.c.l.b16 %v747
    %v1335 = vunpack.c.h.b16 %v747
    %v1336 = vunpack.c.l.b16 %v748
    %v1337 = vunpack.c.l.b16 %v749
    %v1338 = vunpack.c.h.b16 %v749
    %v1339 = vunpack.c.l.b16 %v750
    %v1340 = vunpack.c.h.b16 %v750
    %v1341 = vunpack.c.l.b16 %v751
    %v1342 = vunpack.c.h.b16 %v751
    %v1343 = vunpack.c.l.b16 %v752
    %v1344 = vunpack.c.l.b16 %v753
    %v1345 = vunpack.c.h.b16 %v753
    %v1346 = vunpack.c.l.b16 %v754
    %v1347 = vunpack.c.h.b16 %v754
    %v1348 = vunpack.c.l.b16 %v755
    %v1349 = vunpack.c.h.b16 %v755
    %v1350 = vunpack.c.l.b16 %v756
    %v1351 = vunpack.c.l.b16 %v757
    %v1352 = vunpack.c.h.b16 %v757
    %v1353 = vunpack.c.l.b16 %v758
    %v1354 = vunpack.c.h.b16 %v758
    %v1355 = vunpack.c.l.b16 %v759
    %v1356 = vunpack.c.h.b16 %v759
    %v1357 = vunpack.c.l.b16 %v760
    %v1358 = vunpack.c.l.b16 %v761
    %v1359 = vunpack.c.h.b16 %v761
    %v1360 = vunpack.c.l.b16 %v762
    %v1361 = vunpack.c.h.b16 %v762
    %v1362 = vunpack.c.l.b16 %v763
    %v1363 = vunpack.c.h.b16 %v763
    %v1364 = vunpack.c.l.b16 %v764
    %v1365 = vunpack.c.l.b16 %v765
    %v1366 = vunpack.c.h.b16 %v765
    %v1367 = vunpack.c.l.b16 %v766
    %v1368 = vunpack.c.h.b16 %v766
    %v1369 = vunpack.c.l.b16 %v767
    %v1370 = vunpack.c.h.b16 %v767
    %v1371 = vunpack.c.l.b16 %v768
    %v1372 = vunpack.c.l.b16 %v769
    %v1373 = vunpack.c.h.b16 %v769
    %v1374 = vunpack.c.l.b16 %v770
    %v1375 = vunpack.c.h.b16 %v770
    %v1376 = vunpack.c.l.b16 %v771
    %v1377 = vunpack.c.h.b16 %v771
    %v1378 = vunpack.c.l.b16 %v772
    %v1379 = vunpack.c.l.b16 %v773
    %v1380 = vunpack.c.h.b16 %v773
    %v1381 = vunpack.c.l.b16 %v774
    %v1382 = vunpack.c.h.b16 %v774
    %v1383 = vunpack.c.l.b16 %v775
    %v1384 = vunpack.c.h.b16 %v775
    %v1385 = vunpack.c.l.b16 %v776
    %v1386 = vunpack.c.l.b16 %v777
    %v1387 = vunpack.c.h.b16 %v777
    %v1388 = vunpack.c.l.b16 %v778
    %v1389 = vunpack.c.h.b16 %v778
    %v1390 = vunpack.c.l.b16 %v779
    %v1391 = vunpack.c.h.b16 %v779
    %v1392 = vunpack.c.l.b16 %v780
    %v1393 = vunpack.c.l.b16 %v781
    %v1394 = vunpack.c.h.b16 %v781
    %v1395 = vunpack.c.l.b16 %v782
    %v1396 = vunpack.c.h.b16 %v782
    %v1397 = vunpack.c.l.b16 %v783
    %v1398 = vunpack.c.h.b16 %v783
    %v1399 = vunpack.c.l.b16 %v784
    %v1400 = vunpack.c.l.b16 %v785
    %v1401 = vunpack.c.h.b16 %v785
    %v1402 = vunpack.c.l.b16 %v786
    %v1403 = vunpack.c.h.b16 %v786
    %v1404 = vunpack.c.l.b16 %v787
    %v1405 = vunpack.c.h.b16 %v787
    %v1406 = vunpack.c.l.b16 %v788
    %v1407 = vunpack.c.l.b16 %v789
    %v1408 = vunpack.c.h.b16 %v789
    %v1409 = vunpack.c.l.b16 %v790
    %v1410 = vunpack.c.h.b16 %v790
    %v1411 = vunpack.c.l.b16 %v791
    %v1412 = vunpack.c.h.b16 %v791
    %v1413 = vunpack.c.l.b16 %v792
    %v1414 = vunpack.c.l.b16 %v793
    %v1415 = vunpack.c.h.b16 %v793
    %v1416 = vunpack.c.l.b16 %v794
    %v1417 = vunpack.c.h.b16 %v794
    %v1418 = vunpack.c.l.b16 %v795
    %v1419 = vunpack.c.h.b16 %v795
    %v1420 = vunpack.c.l.b16 %v796
    %v1421 = vunpack.c.l.b16 %v797
    %v1422 = vunpack.c.h.b16 %v797
    %v1423 = vunpack.c.l.b16 %v798
    %v1424 = vunpack.c.h.b16 %v798
    %v1425 = vunpack.c.l.b16 %v799
    %v1426 = vunpack.c.h.b16 %v799
    %v1427 = vunpack.c.l.b16 %v800
    %v1428 = vunpack.c.l.b16 %v801
    %v1429 = vunpack.c.h.b16 %v801
    %v1430 = vunpack.c.l.b16 %v802
    %v1431 = vunpack.c.h.b16 %v802
    %v1432 = vunpack.c.l.b16 %v803
    %v1433 = vunpack.c.h.b16 %v803
    %v1434 = vunpack.c.l.b16 %v804
    %v1435 = vunpack.c.l.b16 %v805
    %v1436 = vunpack.c.h.b16 %v805
    %v1437 = vunpack.c.l.b16 %v806
    %v1438 = vunpack.c.h.b16 %v806
    %v1439 = vunpack.c.l.b16 %v807
    %v1440 = vunpack.c.h.b16 %v807
    %v1441 = vunpack.c.l.b16 %v808
    %v1442 = vunpack.c.l.b16 %v809
    %v1443 = vunpack.c.h.b16 %v809
    %v1444 = vunpack.c.l.b16 %v810
    %v1445 = vunpack.c.h.b16 %v810
    %v1446 = vunpack.c.l.b16 %v811
    %v1447 = vunpack.c.h.b16 %v811
    %v1448 = vunpack.c.l.b16 %v812
    %v1449 = vunpack.c.l.b16 %v813
    %v1450 = vunpack.c.h.b16 %v813
    %v1451 = vunpack.c.l.b16 %v814
    %v1452 = vunpack.c.h.b16 %v814
    %v1453 = vunpack.c.l.b16 %v815
    %v1454 = vunpack.c.h.b16 %v815
    %v1455 = vunpack.c.l.b16 %v816
    %v1456 = vunpack.c.l.b16 %v817
    %v1457 = vunpack.c.h.b16 %v817
    %v1458 = vunpack.c.l.b16 %v818
    %v1459 = vunpack.c.h.b16 %v818
    %v1460 = vunpack.c.l.b16 %v819
    %v1461 = vunpack.c.h.b16 %v819
    %v1462 = vunpack.c.l.b16 %v820
    %v1463 = vunpack.c.l.b16 %v821
    %v1464 = vunpack.c.h.b16 %v821
    %v1465 = vunpack.c.l.b16 %v822
    %v1466 = vunpack.c.h.b16 %v822
    %v1467 = vunpack.c.l.b16 %v823
    %v1468 = vunpack.c.h.b16 %v823
    %v1469 = vunpack.c.l.b16 %v824
    %v1470 = vunpack.c.l.b16 %v825
    %v1471 = vunpack.c.h.b16 %v825
    %v1472 = vunpack.c.l.b16 %v826
    %v1473 = vunpack.c.h.b16 %v826
    %v1474 = vunpack.c.l.b16 %v827
    %v1475 = vunpack.c.h.b16 %v827
    %v1476 = vunpack.c.l.b16 %v828
    %v1477 = vunpack.c.l.b16 %v829
    %v1478 = vunpack.c.h.b16 %v829
    %v1479 = vunpack.c.l.b16 %v830
    %v1480 = vunpack.c.h.b16 %v830
    %v1481 = vunpack.c.l.b16 %v831
    %v1482 = vunpack.c.h.b16 %v831
    %v1483 = vunpack.c.l.b16 %v832
    %v1484 = vunpack.c.l.b16 %v833
    %v1485 = vunpack.c.h.b16 %v833
    %v1486 = vunpack.c.l.b16 %v834
    %v1487 = vunpack.c.h.b16 %v834
    %v1488 = vunpack.c.l.b16 %v835
    %v1489 = vunpack.c.h.b16 %v835
    %v1490 = vunpack.c.l.b16 %v836
    %v1491 = vunpack.c.l.b16 %v837
    %v1492 = vunpack.c.h.b16 %v837
    %v1493 = vunpack.c.l.b16 %v838
    %v1494 = vunpack.c.h.b16 %v838
    %v1495 = vunpack.c.l.b16 %v839
    %v1496 = vunpack.c.h.b16 %v839
    %v1497 = vunpack.c.l.b16 %v840
    %v1498 = vunpack.c.l.b16 %v841
    %v1499 = vunpack.c.h.b16 %v841
    %v1500 = vunpack.c.l.b16 %v842
    %v1501 = vunpack.c.h.b16 %v842
    %v1502 = vunpack.c.l.b16 %v843
    %v1503 = vunpack.c.h.b16 %v843
    %v1504 = vunpack.c.l.b16 %v844
    %v1505 = vunpack.c.l.b16 %v845
    %v1506 = vunpack.c.h.b16 %v845
    %v1507 = vunpack.c.l.b16 %v846
    %v1508 = vunpack.c.h.b16 %v846
    %v1509 = vunpack.c.l.b16 %v847
    %v1510 = vunpack.c.h.b16 %v847
    %v1511 = vunpack.c.l.b16 %v848
    %v1512 = vunpack.c.l.b16 %v849
    %v1513 = vunpack.c.h.b16 %v849
    %v1514 = vunpack.c.l.b16 %v850
    %v1515 = vunpack.c.h.b16 %v850
    %v1516 = vunpack.c.l.b16 %v851
    %v1517 = vunpack.c.h.b16 %v851
    %v1518 = vunpack.c.l.b16 %v852
    %v1519 = vunpack.c.l.b16 %v853
    %v1520 = vunpack.c.h.b16 %v853
    %v1521 = vunpack.c.l.b16 %v854
    %v1522 = vunpack.c.h.b16 %v854
    %v1523 = vunpack.c.l.b16 %v855
    %v1524 = vunpack.c.h.b16 %v855
    %v1525 = vunpack.c.l.b16 %v856
    %v1526 = vunpack.c.l.b16 %v857
    %v1527 = vunpack.c.h.b16 %v857
    %v1528 = vunpack.c.l.b16 %v858
    %v1529 = vunpack.c.h.b16 %v858
    %v1530 = vunpack.c.l.b16 %v859
    %v1531 = vunpack.c.h.b16 %v859
    %v1532 = vunpack.c.l.b16 %v860
    %v1533 = vunpack.c.l.b16 %v861
    %v1534 = vunpack.c.h.b16 %v861
    %v1535 = vunpack.c.l.b16 %v862
    %v1536 = vunpack.c.h.b16 %v862
    %v1537 = vunpack.c.l.b16 %v863
    %v1538 = vunpack.c.h.b16 %v863
    %v1539 = vunpack.c.l.b16 %v864
    %v1540 = vunpack.c.l.b16 %v865
    %v1541 = vunpack.c.h.b16 %v865
    %v1542 = vunpack.c.l.b16 %v866
    %v1543 = vunpack.c.h.b16 %v866
    %v1544 = vunpack.c.l.b16 %v867
    %v1545 = vunpack.c.h.b16 %v867
    %v1546 = vunpack.c.l.b16 %v868
    %v1547 = vunpack.c.l.b16 %v869
    %v1548 = vunpack.c.h.b16 %v869
    %v1549 = vunpack.c.l.b16 %v870
    %v1550 = vunpack.c.h.b16 %v870
    %v1551 = vunpack.c.l.b16 %v871
    %v1552 = vunpack.c.h.b16 %v871
    %v1553 = vunpack.c.l.b16 %v872
    %v1554 = vunpack.c.l.b16 %v873
    %v1555 = vunpack.c.h.b16 %v873
    %v1556 = vunpack.c.l.b16 %v874
    %v1557 = vunpack.c.h.b16 %v874
    %v1558 = vunpack.c.l.b16 %v875
    %v1559 = vunpack.c.h.b16 %v875
    %v1560 = vunpack.c.l.b16 %v876
    %v1561 = vunpack.c.l.b16 %v877
    %v1562 = vunpack.c.h.b16 %v877
    %v1563 = vunpack.c.l.b16 %v878
    %v1564 = vunpack.c.h.b16 %v878
    %v1565 = vunpack.c.l.b16 %v879
    %v1566 = vunpack.c.h.b16 %v879
    %v1567 = vunpack.c.l.b16 %v880
    %v1568 = vunpack.c.l.b16 %v881
    %v1569 = vunpack.c.h.b16 %v881
    %v1570 = vunpack.c.l.b16 %v882
    %v1571 = vunpack.c.h.b16 %v882
    %v1572 = vunpack.c.l.b16 %v883
    %v1573 = vunpack.c.h.b16 %v883
    %v1574 = vunpack.c.l.b16 %v884
    %v1575 = vunpack.c.l.b16 %v885
    %v1576 = vunpack.c.h.b16 %v885
    %v1577 = vunpack.c.l.b16 %v886
    %v1578 = vunpack.c.h.b16 %v886
    %v1579 = vunpack.c.l.b16 %v887
    %v1580 = vunpack.c.h.b16 %v887
    %v1581 = vunpack.c.l.b16 %v888
    %v1582 = vunpack.c.l.b16 %v889
    %v1583 = vunpack.c.h.b16 %v889
    %v1584 = vunpack.c.l.b16 %v890
    %v1585 = vunpack.c.h.b16 %v890
    %v1586 = vunpack.c.l.b16 %v891
    %v1587 = vunpack.c.h.b16 %v891
    %v1588 = vunpack.c.l.b16 %v892
    %v1589 = vunpack.c.l.b16 %v893
    %v1590 = vunpack.c.h.b16 %v893
    %v1591 = vunpack.c.l.b16 %v894
    %v1592 = vunpack.c.h.b16 %v894
    %v1593 = vunpack.c.l.b16 %v895
    %v1594 = vunpack.c.h.b16 %v895
    %v1595 = vunpack.c.l.b16 %v896
    %v1596 = vunpack.c.l.b16 %v897
    %v1597 = vunpack.c.h.b16 %v897
    %v1598 = vunpack.c.l.b16 %v898
    %v1599 = vunpack.c.h.b16 %v898
    %v1600 = vunpack.c.l.b16 %v899
    %v1601 = vunpack.c.h.b16 %v899
    %v1602 = vunpack.c.l.b16 %v900
    %v1603 = vunpack.c.l.b16 %v901
    %v1604 = vunpack.c.h.b16 %v901
    %v1605 = vunpack.c.l.b16 %v902
    %v1606 = vunpack.c.h.b16 %v902
    %v1607 = vunpack.c.l.b16 %v903
    %v1608 = vunpack.c.h.b16 %v903
    %v1609 = vunpack.c.l.b16 %v904
    %v1610 = vunpack.c.l.b16 %v905
    %v1611 = vunpack.c.h.b16 %v905
    %v1612 = vunpack.c.l.b16 %v906
    %v1613 = vunpack.c.h.b16 %v906
    %v1614 = vunpack.c.l.b16 %v907
    %v1615 = vunpack.c.h.b16 %v907
    %v1616 = vunpack.c.l.b16 %v908
    %v1617 = vunpack.c.l.b16 %v909
    %v1618 = vunpack.c.h.b16 %v909
    %v1619 = vunpack.c.l.b16 %v910
    %v1620 = vunpack.c.h.b16 %v910
    %v1621 = vunpack.c.l.b16 %v911
    %v1622 = vunpack.c.h.b16 %v911
    %v1623 = vunpack.c.l.b16 %v912
    %v1624 = vunpack.c.l.b16 %v913
    %v1625 = vunpack.c.h.b16 %v913
    %v1626 = vunpack.c.l.b16 %v914
    %v1627 = vunpack.c.h.b16 %v914
    %v1628 = vunpack.c.l.b16 %v915
    %v1629 = vunpack.c.h.b16 %v915
    %v1630 = vunpack.c.l.b16 %v916
    %v1631 = vunpack.c.l.b16 %v917
    %v1632 = vunpack.c.h.b16 %v917
    %v1633 = vunpack.c.l.b16 %v918
    %v1634 = vunpack.c.h.b16 %v918
    %v1635 = vunpack.c.l.b16 %v919
    %v1636 = vunpack.c.h.b16 %v919
    %v1637 = vunpack.c.l.b16 %v920
    %v1638 = vunpack.c.l.b16 %v921
    %v1639 = vunpack.c.h.b16 %v921
    %v1640 = vunpack.c.l.b16 %v922
    %v1641 = vunpack.c.h.b16 %v922
    %v1642 = vunpack.c.l.b16 %v923
    %v1643 = vunpack.c.h.b16 %v923
    %v1644 = vunpack.c.l.b16 %v924
    %v1645 = vunpack.c.l.b16 %v925
    %v1646 = vunpack.c.h.b16 %v925
    %v1647 = vunpack.c.l.b16 %v926
    %v1648 = vunpack.c.h.b16 %v926
    %v1649 = vunpack.c.l.b16 %v927
    %v1650 = vunpack.c.h.b16 %v927
    %v1651 = vunpack.c.l.b16 %v928
    %v1652 = vunpack.c.l.b16 %v929
    %v1653 = vunpack.c.h.b16 %v929
    %v1654 = vunpack.c.l.b16 %v930
    %v1655 = vunpack.c.h.b16 %v930
    %v1656 = vunpack.c.l.b16 %v931
    %v1657 = vunpack.c.h.b16 %v931
    %v1658 = vunpack.c.l.b16 %v932
    %v1659 = vunpack.c.l.b16 %v933
    %v1660 = vunpack.c.h.b16 %v933
    %v1661 = vunpack.c.l.b16 %v934
    %v1662 = vunpack.c.h.b16 %v934
    %v1663 = vunpack.c.l.b16 %v935
    %v1664 = vunpack.c.h.b16 %v935
    %v1665 = vunpack.c.l.b16 %v936
    %v1666 = vunpack.c.l.b16 %v937
    %v1667 = vunpack.c.h.b16 %v937
    %v1668 = vunpack.c.l.b16 %v938
    %v1669 = vunpack.c.h.b16 %v938
    %v1670 = vunpack.c.l.b16 %v939
    %v1671 = vunpack.c.h.b16 %v939
    %v1672 = vunpack.c.l.b16 %v940
    %v1673 = vunpack.c.l.b16 %v941
    %v1674 = vunpack.c.h.b16 %v941
    %v1675 = vunpack.c.l.b16 %v942
    %v1676 = vunpack.c.h.b16 %v942
    %v1677 = vunpack.c.l.b16 %v943
    %v1678 = vunpack.c.h.b16 %v943
    %v1679 = vunpack.c.l.b16 %v944
    %v1680 = vunpack.c.l.b16 %v945
    %v1681 = vunpack.c.h.b16 %v945
    %v1682 = vunpack.c.l.b16 %v946
    %v1683 = vunpack.c.h.b16 %v946
    %v1684 = vunpack.c.l.b16 %v947
    %v1685 = vunpack.c.h.b16 %v947
    %v1686 = vunpack.c.l.b16 %v948
    %v1687 = vunpack.c.l.b16 %v949
    %v1688 = vunpack.c.h.b16 %v949
    %v1689 = vunpack.c.l.b16 %v950
    %v1690 = vunpack.c.h.b16 %v950
    %v1691 = vunpack.c.l.b16 %v951
    %v1692 = vunpack.c.h.b16 %v951
    %v1693 = vunpack.c.l.b16 %v952
    %v1694 = vpack.c.b16 %v1253, %v1246
    %v1695 = vpack.c.b16 %v1254, %v1247
    %v1696 = vpack.c.b16 %v1255, %v1248
    %v1697 = vpack.c.b16 %v1256, %v1249
    %v1698 = vpack.c.b16 %v1257, %v1250
    %v1699 = vpack.c.b16 %v1258, %v1251
    %v1700 = vpack.c.b16 %v1259, %v1252
    %v1701 = vpack.c.b16 %v1267, %v1260
    %v1702 = vpack.c.b16 %v1268, %v1261
    %v1703 = vpack.c.b16 %v1269, %v1262
    %v1704 = vpack.c.b16 %v1270, %v1263
    %v1705 = vpack.c.b16 %v1271, %v1264
    %v1706 = vpack.c.b16 %v1272, %v1265
    %v1707 = vpack.c.b16 %v1273, %v1266
    %v1708 = vpack.c.b16 %v1281, %v1274
    %v1709 = vpack.c.b16 %v1282, %v1275
    %v1710 = vpack.c.b16 %v1283, %v1276
    %v1711 = vpack.c.b16 %v1284, %v1277
    %v1712 = vpack.c.b16 %v1285, %v1278
    %v1713 = vpack.c.b16 %v1286, %v1279
    %v1714 = vpack.c.b16 %v1287, %v1280
    %v1715 = vpack.c.b16 %v1295, %v1288
    %v1716 = vpack.c.b16 %v1296, %v1289
    %v1717 = vpack.c.b16 %v1297, %v1290
    %v1718 = vpack.c.b16 %v1298, %v1291
    %v1719 = vpack.c.b16 %v1299, %v1292
    %v1720 = vpack.c.b16 %v1300, %v1293
    %v1721 = vpack.c.b16 %v1301, %v1294
    %v1722 = vpack.c.b16 %v1309, %v1302
    %v1723 = vpack.c.b16 %v1310, %v1303
    %v1724 = vpack.c.b16 %v1311, %v1304
    %v1725 = vpack.c.b16 %v1312, %v1305
    %v1726 = vpack.c.b16 %v1313, %v1306
    %v1727 = vpack.c.b16 %v1314, %v1307
    %v1728 = vpack.c.b16 %v1315, %v1308
    %v1729 = vpack.c.b16 %v1323, %v1316
    %v1730 = vpack.c.b16 %v1324, %v1317
    %v1731 = vpack.c.b16 %v1325, %v1318
    %v1732 = vpack.c.b16 %v1326, %v1319
    %v1733 = vpack.c.b16 %v1327, %v1320
    %v1734 = vpack.c.b16 %v1328, %v1321
    %v1735 = vpack.c.b16 %v1329, %v1322
    %v1736 = vpack.c.b16 %v1337, %v1330
    %v1737 = vpack.c.b16 %v1338, %v1331
    %v1738 = vpack.c.b16 %v1339, %v1332
    %v1739 = vpack.c.b16 %v1340, %v1333
    %v1740 = vpack.c.b16 %v1341, %v1334
    %v1741 = vpack.c.b16 %v1342, %v1335
    %v1742 = vpack.c.b16 %v1343, %v1336
    %v1743 = vpack.c.b16 %v1351, %v1344
    %v1744 = vpack.c.b16 %v1352, %v1345
    %v1745 = vpack.c.b16 %v1353, %v1346
    %v1746 = vpack.c.b16 %v1354, %v1347
    %v1747 = vpack.c.b16 %v1355, %v1348
    %v1748 = vpack.c.b16 %v1356, %v1349
    %v1749 = vpack.c.b16 %v1357, %v1350
    %v1750 = vpack.c.b16 %v1365, %v1358
    %v1751 = vpack.c.b16 %v1366, %v1359
    %v1752 = vpack.c.b16 %v1367, %v1360
    %v1753 = vpack.c.b16 %v1368, %v1361
    %v1754 = vpack.c.b16 %v1369, %v1362
    %v1755 = vpack.c.b16 %v1370, %v1363
    %v1756 = vpack.c.b16 %v1371, %v1364
    %v1757 = vpack.c.b16 %v1379, %v1372
    %v1758 = vpack.c.b16 %v1380, %v1373
    %v1759 = vpack.c.b16 %v1381, %v1374
    %v1760 = vpack.c.b16 %v1382, %v1375
    %v1761 = vpack.c.b16 %v1383, %v1376
    %v1762 = vpack.c.b16 %v1384, %v1377
    %v1763 = vpack.c.b16 %v1385, %v1378
    %v1764 = vpack.c.b16 %v1393, %v1386
    %v1765 = vpack.c.b16 %v1394, %v1387
    %v1766 = vpack.c.b16 %v1395, %v1388
    %v1767 = vpack.c.b16 %v1396, %v1389
    %v1768 = vpack.c.b16 %v1397, %v1390
    %v1769 = vpack.c.b16 %v1398, %v1391
    %v1770 = vpack.c.b16 %v1399, %v1392
    %v1771 = vpack.c.b16 %v1407, %v1400
    %v1772 = vpack.c.b16 %v1408, %v1401
    %v1773 = vpack.c.b16 %v1409, %v1402
    %v1774 = vpack.c.b16 %v1410, %v1403
    %v1775 = vpack.c.b16 %v1411, %v1404
    %v1776 = vpack.c.b16 %v1412, %v1405
    %v1777 = vpack.c.b16 %v1413, %v1406
    %v1778 = vpack.c.b16 %v1421, %v1414
    %v1779 = vpack.c.b16 %v1422, %v1415
    %v1780 = vpack.c.b16 %v1423, %v1416
    %v1781 = vpack.c.b16 %v1424, %v1417
    %v1782 = vpack.c.b16 %v1425, %v1418
    %v1783 = vpack.c.b16 %v1426, %v1419
    %v1784 = vpack.c.b16 %v1427, %v1420
    %v1785 = vpack.c.b16 %v1435, %v1428
    %v1786 = vpack.c.b16 %v1436, %v1429
    %v1787 = vpack.c.b16 %v1437, %v1430
    %v1788 = vpack.c.b16 %v1438, %v1431
    %v1789 = vpack.c.b16 %v1439, %v1432
    %v1790 = vpack.c.b16 %v1440, %v1433
    %v1791 = vpack.c.b16 %v1441, %v1434
    %v1792 = vpack.c.b16 %v1449, %v1442
    %v1793 = vpack.c.b16 %v1450, %v1443
    %v1794 = vpack.c.b16 %v1451, %v1444
    %v1795 = vpack.c.b16 %v1452, %v1445
    %v1796 = vpack.c.b16 %v1453, %v1446
    %v1797 = vpack.c.b16 %v1454, %v1447
    %v1798 = vpack.c.b16 %v1455, %v1448
    %v1799 = vpack.c.b16 %v1463, %v1456
    %v1800 = vpack.c.b16 %v1464, %v1457
    %v1801 = vpack.c.b16 %v1465, %v1458
    %v1802 = vpack.c.b16 %v1466, %v1459
    %v1803 = vpack.c.b16 %v1467, %v1460
    %v1804 = vpack.c.b16 %v1468, %v1461
    %v1805 = vpack.c.b16 %v1469, %v1462
    %v1806 = vpack.c.b16 %v1477, %v1470
    %v1807 = vpack.c.b16 %v1478, %v1471
    %v1808 = vpack.c.b16 %v1479, %v1472
    %v1809 = vpack.c.b16 %v1480, %v1473
    %v1810 = vpack.c.b16 %v1481, %v1474
    %v1811 = vpack.c.b16 %v1482, %v1475
    %v1812 = vpack.c.b16 %v1483, %v1476
    %v1813 = vpack.c.b16 %v1491, %v1484
    %v1814 = vpack.c.b16 %v1492, %v1485
    %v1815 = vpack.c.b16 %v1493, %v1486
    %v1816 = vpack.c.b16 %v1494, %v1487
    %v1817 = vpack.c.b16 %v1495, %v1488
    %v1818 = vpack.c.b16 %v1496, %v1489
    %v1819 = vpack.c.b16 %v1497, %v1490
    %v1820 = vpack.c.b16 %v1505, %v1498
    %v1821 = vpack.c.b16 %v1506, %v1499
    %v1822 = vpack.c.b16 %v1507, %v1500
    %v1823 = vpack.c.b16 %v1508, %v1501
    %v1824 = vpack.c.b16 %v1509, %v1502
    %v1825 = vpack.c.b16 %v1510, %v1503
    %v1826 = vpack.c.b16 %v1511, %v1504
    %v1827 = vpack.c.b16 %v1519, %v1512
    %v1828 = vpack.c.b16 %v1520, %v1513
    %v1829 = vpack.c.b16 %v1521, %v1514
    %v1830 = vpack.c.b16 %v1522, %v1515
    %v1831 = vpack.c.b16 %v1523, %v1516
    %v1832 = vpack.c.b16 %v1524, %v1517
    %v1833 = vpack.c.b16 %v1525, %v1518
    %v1834 = vpack.c.b16 %v1533, %v1526
    %v1835 = vpack.c.b16 %v1534, %v1527
    %v1836 = vpack.c.b16 %v1535, %v1528
    %v1837 = vpack.c.b16 %v1536, %v1529
    %v1838 = vpack.c.b16 %v1537, %v1530
    %v1839 = vpack.c.b16 %v1538, %v1531
    %v1840 = vpack.c.b16 %v1539, %v1532
    %v1841 = vpack.c.b16 %v1547, %v1540
    %v1842 = vpack.c.b16 %v1548, %v1541
    %v1843 = vpack.c.b16 %v1549, %v1542
    %v1844 = vpack.c.b16 %v1550, %v1543
    %v1845 = vpack.c.b16 %v1551, %v1544
    %v1846 = vpack.c.b16 %v1552, %v1545
    %v1847 = vpack.c.b16 %v1553, %v1546
    %v1848 = vpack.c.b16 %v1561, %v1554
    %v1849 = vpack.c.b16 %v1562, %v1555
    %v1850 = vpack.c.b16 %v1563, %v1556
    %v1851 = vpack.c.b16 %v1564, %v1557
    %v1852 = vpack.c.b16 %v1565, %v1558
    %v1853 = vpack.c.b16 %v1566, %v1559
    %v1854 = vpack.c.b16 %v1567, %v1560
    %v1855 = vpack.c.b16 %v1575, %v1568
    %v1856 = vpack.c.b16 %v1576, %v1569
    %v1857 = vpack.c.b16 %v1577, %v1570
    %v1858 = vpack.c.b16 %v1578, %v1571
    %v1859 = vpack.c.b16 %v1579, %v1572
    %v1860 = vpack.c.b16 %v1580, %v1573
    %v1861 = vpack.c.b16 %v1581, %v1574
    %v1862 = vpack.c.b16 %v1589, %v1582
    %v1863 = vpack.c.b16 %v1590, %v1583
    %v1864 = vpack.c.b16 %v1591, %v1584
    %v1865 = vpack.c.b16 %v1592, %v1585
    %v1866 = vpack.c.b16 %v1593, %v1586
    %v1867 = vpack.c.b16 %v1594, %v1587
    %v1868 = vpack.c.b16 %v1595, %v1588
    %v1869 = vpack.c.b16 %v1603, %v1596
    %v1870 = vpack.c.b16 %v1604, %v1597
    %v1871 = vpack.c.b16 %v1605, %v1598
    %v1872 = vpack.c.b16 %v1606, %v1599
    %v1873 = vpack.c.b16 %v1607, %v1600
    %v1874 = vpack.c.b16 %v1608, %v1601
    %v1875 = vpack.c.b16 %v1609, %v1602
    %v1876 = vpack.c.b16 %v1617, %v1610
    %v1877 = vpack.c.b16 %v1618, %v1611
    %v1878 = vpack.c.b16 %v1619, %v1612
    %v1879 = vpack.c.b16 %v1620, %v1613
    %v1880 = vpack.c.b16 %v1621, %v1614
    %v1881 = vpack.c.b16 %v1622, %v1615
    %v1882 = vpack.c.b16 %v1623, %v1616
    %v1883 = vpack.c.b16 %v1631, %v1624
    %v1884 = vpack.c.b16 %v1632, %v1625
    %v1885 = vpack.c.b16 %v1633, %v1626
    %v1886 = vpack.c.b16 %v1634, %v1627
    %v1887 = vpack.c.b16 %v1635, %v1628
    %v1888 = vpack.c.b16 %v1636, %v1629
    %v1889 = vpack.c.b16 %v1637, %v1630
    %v1890 = vpack.c.b16 %v1645, %v1638
    %v1891 = vpack.c.b16 %v1646, %v1639
    %v1892 = vpack.c.b16 %v1647, %v1640
    %v1893 = vpack.c.b16 %v1648, %v1641
    %v1894 = vpack.c.b16 %v1649, %v1642
    %v1895 = vpack.c.b16 %v1650, %v1643
    %v1896 = vpack.c.b16 %v1651, %v1644
    %v1897 = vpack.c.b16 %v1659, %v1652
    %v1898 = vpack.c.b16 %v1660, %v1653
    %v1899 = vpack.c.b16 %v1661, %v1654
    %v1900 = vpack.c.b16 %v1662, %v1655
    %v1901 = vpack.c.b16 %v1663, %v1656
    %v1902 = vpack.c.b16 %v1664, %v1657
    %v1903 = vpack.c.b16 %v1665, %v1658
    %v1904 = vpack.c.b16 %v1673, %v1666
    %v1905 = vpack.c.b16 %v1674, %v1667
    %v1906 = vpack.c.b16 %v1675, %v1668
    %v1907 = vpack.c.b16 %v1676, %v1669
    %v1908 = vpack.c.b16 %v1677, %v1670
    %v1909 = vpack.c.b16 %v1678, %v1671
    %v1910 = vpack.c.b16 %v1679, %v1672
    %v1911 = vpack.c.b16 %v1687, %v1680
    %v1912 = vpack.c.b16 %v1688, %v1681
    %v1913 = vpack.c.b16 %v1689, %v1682
    %v1914 = vpack.c.b16 %v1690, %v1683
    %v1915 = vpack.c.b16 %v1691, %v1684
    %v1916 = vpack.c.b16 %v1692, %v1685
    %v1917 = vpack.c.b16 %v1693, %v1686
    %2142 = vmatprep.subr.bf16.mxu0 %v1744
    %2143 = vmatpush1.bf16.msra.mxu0 %v1743
    %2144 = vmatprep.subr.bf16.mxu0 %v1737
    %2145 = vmatpush1.bf16.msra.mxu0 %v1736
    %2146 = vmatprep.subr.bf16.mxu0 %v1730
    %2147 = vmatpush1.bf16.msra.mxu0 %v1729
    %2148 = vmatprep.subr.bf16.mxu0 %v1723
    %2149 = vmatpush1.bf16.msra.mxu0 %v1722
    %2150 = vmatprep.subr.bf16.mxu0 %v1716
    %2151 = vmatpush1.bf16.msra.mxu0 %v1715
    %2152 = vmatprep.subr.bf16.mxu0 %v1709
    %2153 = vmatpush1.bf16.msra.mxu0 %v1708
    %2154 = vmatprep.subr.bf16.mxu0 %v1702
    %2155 = vmatpush1.bf16.msra.mxu0 %v1701
    %2156 = vmatprep.subr.bf16.mxu0 %v1695
    %2157 = vmatpush1.bf16.msra.mxu0 %v1694
    %2158 = vmatprep.subr.bf16.mxu0 %v1800
    %2159 = vmatpush2.bf16.msra.mxu0 %v1799
    %2160 = vmatprep.subr.bf16.mxu0 %v1793
    %2161 = vmatpush2.bf16.msra.mxu0 %v1792
    %2162 = vmatprep.subr.bf16.mxu0 %v1786
    %2163 = vmatpush2.bf16.msra.mxu0 %v1785
    %2164 = vmatprep.subr.bf16.mxu0 %v1779
    %2165 = vmatpush2.bf16.msra.mxu0 %v1778
    %2166 = vmatprep.subr.bf16.mxu0 %v1772
    %2167 = vmatpush2.bf16.msra.mxu0 %v1771
    %2168 = vmatprep.subr.bf16.mxu0 %v1765
    %2169 = vmatpush2.bf16.msra.mxu0 %v1764
    %2170 = vmatprep.subr.bf16.mxu0 %v1758
    %2171 = vmatpush2.bf16.msra.mxu0 %v1757
    %2172 = vmatprep.subr.bf16.mxu0 %v1751
    %2173 = vmatpush2.bf16.msra.mxu0 %v1750
    %2174 = vmatprep.mubr.bf16.mxu0 %v694
    %2175 = vmatmul.mubr.bf16.gmra.mxu0 %v693
    %v2176 = vpop.f32.mrf.mxu0
    %v2177 = vadd.f32 %v958, %v2176
    %v2178 = vpop.f32.mrf.mxu0
    %v2179 = vadd.f32 %v962, %v2178
    %v2180 = vpop.f32.mrf.mxu0
    %v2181 = vadd.f32 %v958, %v2180
    %v2182 = vpop.f32.mrf.mxu0
    %v2183 = vadd.f32 %v962, %v2182
    %2184 = vdwg.mxu0
    %2185 = vmatprep.subr.bf16.mxu0 %v1856
    %2186 = vmatpush1.bf16.msra.mxu0 %v1855
    %2187 = vmatprep.subr.bf16.mxu0 %v1849
    %2188 = vmatpush1.bf16.msra.mxu0 %v1848
    %2189 = vmatprep.subr.bf16.mxu0 %v1842
    %2190 = vmatpush1.bf16.msra.mxu0 %v1841
    %2191 = vmatprep.subr.bf16.mxu0 %v1835
    %2192 = vmatpush1.bf16.msra.mxu0 %v1834
    %2193 = vmatprep.subr.bf16.mxu0 %v1828
    %2194 = vmatpush1.bf16.msra.mxu0 %v1827
    %2195 = vmatprep.subr.bf16.mxu0 %v1821
    %2196 = vmatpush1.bf16.msra.mxu0 %v1820
    %2197 = vmatprep.subr.bf16.mxu0 %v1814
    %2198 = vmatpush1.bf16.msra.mxu0 %v1813
    %2199 = vmatprep.subr.bf16.mxu0 %v1807
    %2200 = vmatpush1.bf16.msra.mxu0 %v1806
    %2201 = vmatprep.subr.bf16.mxu0 %v1912
    %2202 = vmatpush2.bf16.msra.mxu0 %v1911
    %2203 = vmatprep.subr.bf16.mxu0 %v1905
    %2204 = vmatpush2.bf16.msra.mxu0 %v1904
    %2205 = vmatprep.subr.bf16.mxu0 %v1898
    %2206 = vmatpush2.bf16.msra.mxu0 %v1897
    %2207 = vmatprep.subr.bf16.mxu0 %v1891
    %2208 = vmatpush2.bf16.msra.mxu0 %v1890
    %2209 = vmatprep.subr.bf16.mxu0 %v1884
    %2210 = vmatpush2.bf16.msra.mxu0 %v1883
    %2211 = vmatprep.subr.bf16.mxu0 %v1877
    %2212 = vmatpush2.bf16.msra.mxu0 %v1876
    %2213 = vmatprep.subr.bf16.mxu0 %v1870
    %2214 = vmatpush2.bf16.msra.mxu0 %v1869
    %2215 = vmatprep.subr.bf16.mxu0 %v1863
    %2216 = vmatpush2.bf16.msra.mxu0 %v1862
    %2217 = vmatprep.mubr.bf16.mxu0 %v696
    %2218 = vmatmul.mubr.bf16.gmra.mxu0 %v695
    %v2219 = vpop.f32.mrf.mxu0
    %v2220 = vadd.f32 %v2177, %v2219
    %v2221 = vpop.f32.mrf.mxu0
    %v2222 = vadd.f32 %v2179, %v2221
    %v2223 = vpop.f32.mrf.mxu0
    %v2224 = vadd.f32 %v2181, %v2223
    %v2225 = vpop.f32.mrf.mxu0
    %v2226 = vadd.f32 %v2183, %v2225
    %2227 = vdwg.mxu0
    %2228 = vmatprep.subr.bf16.mxu0 %v1746
    %2229 = vmatpush1.bf16.msra.mxu0 %v1745
    %2230 = vmatprep.subr.bf16.mxu0 %v1739
    %2231 = vmatpush1.bf16.msra.mxu0 %v1738
    %2232 = vmatprep.subr.bf16.mxu0 %v1732
    %2233 = vmatpush1.bf16.msra.mxu0 %v1731
    %2234 = vmatprep.subr.bf16.mxu0 %v1725
    %2235 = vmatpush1.bf16.msra.mxu0 %v1724
    %2236 = vmatprep.subr.bf16.mxu0 %v1718
    %2237 = vmatpush1.bf16.msra.mxu0 %v1717
    %2238 = vmatprep.subr.bf16.mxu0 %v1711
    %2239 = vmatpush1.bf16.msra.mxu0 %v1710
    %2240 = vmatprep.subr.bf16.mxu0 %v1704
    %2241 = vmatpush1.bf16.msra.mxu0 %v1703
    %2242 = vmatprep.subr.bf16.mxu0 %v1697
    %2243 = vmatpush1.bf16.msra.mxu0 %v1696
    %2244 = vmatprep.subr.bf16.mxu0 %v1802
    %2245 = vmatpush2.bf16.msra.mxu0 %v1801
    %2246 = vmatprep.subr.bf16.mxu0 %v1795
    %2247 = vmatpush2.bf16.msra.mxu0 %v1794
    %2248 = vmatprep.subr.bf16.mxu0 %v1788
    %2249 = vmatpush2.bf16.msra.mxu0 %v1787
    %2250 = vmatprep.subr.bf16.mxu0 %v1781
    %2251 = vmatpush2.bf16.msra.mxu0 %v1780
    %2252 = vmatprep.subr.bf16.mxu0 %v1774
    %2253 = vmatpush2.bf16.msra.mxu0 %v1773
    %2254 = vmatprep.subr.bf16.mxu0 %v1767
    %2255 = vmatpush2.bf16.msra.mxu0 %v1766
    %2256 = vmatprep.subr.bf16.mxu0 %v1760
    %2257 = vmatpush2.bf16.msra.mxu0 %v1759
    %2258 = vmatprep.subr.bf16.mxu0 %v1753
    %2259 = vmatpush2.bf16.msra.mxu0 %v1752
    %2260 = vmatprep.mubr.bf16.mxu0 %v694
    %2261 = vmatmul.mubr.bf16.gmra.mxu0 %v693
    %v2262 = vpop.f32.mrf.mxu0
    %v2263 = vadd.f32 %v966, %v2262
    %v2264 = vpop.f32.mrf.mxu0
    %v2265 = vadd.f32 %v970, %v2264
    %v2266 = vpop.f32.mrf.mxu0
    %v2267 = vadd.f32 %v966, %v2266
    %v2268 = vpop.f32.mrf.mxu0
    %v2269 = vadd.f32 %v970, %v2268
    %2270 = vdwg.mxu0
    %2271 = vmatprep.subr.bf16.mxu0 %v1858
    %2272 = vmatpush1.bf16.msra.mxu0 %v1857
    %2273 = vmatprep.subr.bf16.mxu0 %v1851
    %2274 = vmatpush1.bf16.msra.mxu0 %v1850
    %2275 = vmatprep.subr.bf16.mxu0 %v1844
    %2276 = vmatpush1.bf16.msra.mxu0 %v1843
    %2277 = vmatprep.subr.bf16.mxu0 %v1837
    %2278 = vmatpush1.bf16.msra.mxu0 %v1836
    %2279 = vmatprep.subr.bf16.mxu0 %v1830
    %2280 = vmatpush1.bf16.msra.mxu0 %v1829
    %2281 = vmatprep.subr.bf16.mxu0 %v1823
    %2282 = vmatpush1.bf16.msra.mxu0 %v1822
    %2283 = vmatprep.subr.bf16.mxu0 %v1816
    %2284 = vmatpush1.bf16.msra.mxu0 %v1815
    %2285 = vmatprep.subr.bf16.mxu0 %v1809
    %2286 = vmatpush1.bf16.msra.mxu0 %v1808
    %2287 = vmatprep.subr.bf16.mxu0 %v1914
    %2288 = vmatpush2.bf16.msra.mxu0 %v1913
    %2289 = vmatprep.subr.bf16.mxu0 %v1907
    %2290 = vmatpush2.bf16.msra.mxu0 %v1906
    %2291 = vmatprep.subr.bf16.mxu0 %v1900
    %2292 = vmatpush2.bf16.msra.mxu0 %v1899
    %2293 = vmatprep.subr.bf16.mxu0 %v1893
    %2294 = vmatpush2.bf16.msra.mxu0 %v1892
    %2295 = vmatprep.subr.bf16.mxu0 %v1886
    %2296 = vmatpush2.bf16.msra.mxu0 %v1885
    %2297 = vmatprep.subr.bf16.mxu0 %v1879
    %2298 = vmatpush2.bf16.msra.mxu0 %v1878
    %2299 = vmatprep.subr.bf16.mxu0 %v1872
    %2300 = vmatpush2.bf16.msra.mxu0 %v1871
    %2301 = vmatprep.subr.bf16.mxu0 %v1865
    %2302 = vmatpush2.bf16.msra.mxu0 %v1864
    %2303 = vmatprep.mubr.bf16.mxu0 %v696
    %2304 = vmatmul.mubr.bf16.gmra.mxu0 %v695
    %v2305 = vpop.f32.mrf.mxu0
    %v2306 = vadd.f32 %v2263, %v2305
    %v2307 = vpop.f32.mrf.mxu0
    %v2308 = vadd.f32 %v2265, %v2307
    %v2309 = vpop.f32.mrf.mxu0
    %v2310 = vadd.f32 %v2267, %v2309
    %v2311 = vpop.f32.mrf.mxu0
    %v2312 = vadd.f32 %v2269, %v2311
    %2313 = vdwg.mxu0
    %2314 = vmatprep.subr.bf16.mxu0 %v1748
    %2315 = vmatpush1.bf16.msra.mxu0 %v1747
    %2316 = vmatprep.subr.bf16.mxu0 %v1741
    %2317 = vmatpush1.bf16.msra.mxu0 %v1740
    %2318 = vmatprep.subr.bf16.mxu0 %v1734
    %2319 = vmatpush1.bf16.msra.mxu0 %v1733
    %2320 = vmatprep.subr.bf16.mxu0 %v1727
    %2321 = vmatpush1.bf16.msra.mxu0 %v1726
    %2322 = vmatprep.subr.bf16.mxu0 %v1720
    %2323 = vmatpush1.bf16.msra.mxu0 %v1719
    %2324 = vmatprep.subr.bf16.mxu0 %v1713
    %2325 = vmatpush1.bf16.msra.mxu0 %v1712
    %2326 = vmatprep.subr.bf16.mxu0 %v1706
    %2327 = vmatpush1.bf16.msra.mxu0 %v1705
    %2328 = vmatprep.subr.bf16.mxu0 %v1699
    %2329 = vmatpush1.bf16.msra.mxu0 %v1698
    %2330 = vmatprep.subr.bf16.mxu0 %v1804
    %2331 = vmatpush2.bf16.msra.mxu0 %v1803
    %2332 = vmatprep.subr.bf16.mxu0 %v1797
    %2333 = vmatpush2.bf16.msra.mxu0 %v1796
    %2334 = vmatprep.subr.bf16.mxu0 %v1790
    %2335 = vmatpush2.bf16.msra.mxu0 %v1789
    %2336 = vmatprep.subr.bf16.mxu0 %v1783
    %2337 = vmatpush2.bf16.msra.mxu0 %v1782
    %2338 = vmatprep.subr.bf16.mxu0 %v1776
    %2339 = vmatpush2.bf16.msra.mxu0 %v1775
    %2340 = vmatprep.subr.bf16.mxu0 %v1769
    %2341 = vmatpush2.bf16.msra.mxu0 %v1768
    %2342 = vmatprep.subr.bf16.mxu0 %v1762
    %2343 = vmatpush2.bf16.msra.mxu0 %v1761
    %2344 = vmatprep.subr.bf16.mxu0 %v1755
    %2345 = vmatpush2.bf16.msra.mxu0 %v1754
    %2346 = vmatprep.mubr.bf16.mxu0 %v694
    %2347 = vmatmul.mubr.bf16.gmra.mxu0 %v693
    %v2348 = vpop.f32.mrf.mxu0
    %v2349 = vadd.f32 %v974, %v2348
    %v2350 = vpop.f32.mrf.mxu0
    %v2351 = vadd.f32 %v978, %v2350
    %v2352 = vpop.f32.mrf.mxu0
    %v2353 = vadd.f32 %v974, %v2352
    %v2354 = vpop.f32.mrf.mxu0
    %v2355 = vadd.f32 %v978, %v2354
    %2356 = vdwg.mxu0
    %2357 = vmatprep.subr.bf16.mxu0 %v1860
    %2358 = vmatpush1.bf16.msra.mxu0 %v1859
    %2359 = vmatprep.subr.bf16.mxu0 %v1853
    %2360 = vmatpush1.bf16.msra.mxu0 %v1852
    %2361 = vmatprep.subr.bf16.mxu0 %v1846
    %2362 = vmatpush1.bf16.msra.mxu0 %v1845
    %2363 = vmatprep.subr.bf16.mxu0 %v1839
    %2364 = vmatpush1.bf16.msra.mxu0 %v1838
    %2365 = vmatprep.subr.bf16.mxu0 %v1832
    %2366 = vmatpush1.bf16.msra.mxu0 %v1831
    %2367 = vmatprep.subr.bf16.mxu0 %v1825
    %2368 = vmatpush1.bf16.msra.mxu0 %v1824
    %2369 = vmatprep.subr.bf16.mxu0 %v1818
    %2370 = vmatpush1.bf16.msra.mxu0 %v1817
    %2371 = vmatprep.subr.bf16.mxu0 %v1811
    %2372 = vmatpush1.bf16.msra.mxu0 %v1810
    %2373 = vmatprep.subr.bf16.mxu0 %v1916
    %2374 = vmatpush2.bf16.msra.mxu0 %v1915
    %2375 = vmatprep.subr.bf16.mxu0 %v1909
    %2376 = vmatpush2.bf16.msra.mxu0 %v1908
    %2377 = vmatprep.subr.bf16.mxu0 %v1902
    %2378 = vmatpush2.bf16.msra.mxu0 %v1901
    %2379 = vmatprep.subr.bf16.mxu0 %v1895
    %2380 = vmatpush2.bf16.msra.mxu0 %v1894
    %2381 = vmatprep.subr.bf16.mxu0 %v1888
    %2382 = vmatpush2.bf16.msra.mxu0 %v1887
    %2383 = vmatprep.subr.bf16.mxu0 %v1881
    %2384 = vmatpush2.bf16.msra.mxu0 %v1880
    %2385 = vmatprep.subr.bf16.mxu0 %v1874
    %2386 = vmatpush2.bf16.msra.mxu0 %v1873
    %2387 = vmatprep.subr.bf16.mxu0 %v1867
    %2388 = vmatpush2.bf16.msra.mxu0 %v1866
    %2389 = vmatprep.mubr.bf16.mxu0 %v696
    %2390 = vmatmul.mubr.bf16.gmra.mxu0 %v695
    %v2391 = vpop.f32.mrf.mxu0
    %v2392 = vadd.f32 %v2349, %v2391
    %v2393 = vpop.f32.mrf.mxu0
    %v2394 = vadd.f32 %v2351, %v2393
    %v2395 = vpop.f32.mrf.mxu0
    %v2396 = vadd.f32 %v2353, %v2395
    %v2397 = vpop.f32.mrf.mxu0
    %v2398 = vadd.f32 %v2355, %v2397
    %2399 = vdwg.mxu0
    %2400 = vmatprep.subr.bf16.mxu0 0
    %2401 = vmatpush1.bf16.msra.mxu0 %v1749
    %2402 = vmatprep.subr.bf16.mxu0 0
    %2403 = vmatpush1.bf16.msra.mxu0 %v1742
    %2404 = vmatprep.subr.bf16.mxu0 0
    %2405 = vmatpush1.bf16.msra.mxu0 %v1735
    %2406 = vmatprep.subr.bf16.mxu0 0
    %2407 = vmatpush1.bf16.msra.mxu0 %v1728
    %2408 = vmatprep.subr.bf16.mxu0 0
    %2409 = vmatpush1.bf16.msra.mxu0 %v1721
    %2410 = vmatprep.subr.bf16.mxu0 0
    %2411 = vmatpush1.bf16.msra.mxu0 %v1714
    %2412 = vmatprep.subr.bf16.mxu0 0
    %2413 = vmatpush1.bf16.msra.mxu0 %v1707
    %2414 = vmatprep.subr.bf16.mxu0 0
    %2415 = vmatpush1.bf16.msra.mxu0 %v1700
    %2416 = vmatprep.subr.bf16.mxu0 0
    %2417 = vmatpush2.bf16.msra.mxu0 %v1805
    %2418 = vmatprep.subr.bf16.mxu0 0
    %2419 = vmatpush2.bf16.msra.mxu0 %v1798
    %2420 = vmatprep.subr.bf16.mxu0 0
    %2421 = vmatpush2.bf16.msra.mxu0 %v1791
    %2422 = vmatprep.subr.bf16.mxu0 0
    %2423 = vmatpush2.bf16.msra.mxu0 %v1784
    %2424 = vmatprep.subr.bf16.mxu0 0
    %2425 = vmatpush2.bf16.msra.mxu0 %v1777
    %2426 = vmatprep.subr.bf16.mxu0 0
    %2427 = vmatpush2.bf16.msra.mxu0 %v1770
    %2428 = vmatprep.subr.bf16.mxu0 0
    %2429 = vmatpush2.bf16.msra.mxu0 %v1763
    %2430 = vmatprep.subr.bf16.mxu0 0
    %2431 = vmatpush2.bf16.msra.mxu0 %v1756
    %2432 = vmatprep.mubr.bf16.mxu0 %v694
    %2433 = vmatmul.mubr.bf16.gmra.mxu0 %v693
    %v2434 = vpop.f32.mrf.mxu0
    %v2435 = vadd.f32 %v982, %v2434
    %v2436 = vpop.f32.mrf.mxu0
    %v2437 = vpop.f32.mrf.mxu0
    %v2438 = vadd.f32 %v982, %v2437
    %v2439 = vpop.f32.mrf.mxu0
    %2440 = vdwg.mxu0
    %2441 = vmatprep.subr.bf16.mxu0 0
    %2442 = vmatpush1.bf16.msra.mxu0 %v1861
    %2443 = vmatprep.subr.bf16.mxu0 0
    %2444 = vmatpush1.bf16.msra.mxu0 %v1854
    %2445 = vmatprep.subr.bf16.mxu0 0
    %2446 = vmatpush1.bf16.msra.mxu0 %v1847
    %2447 = vmatprep.subr.bf16.mxu0 0
    %2448 = vmatpush1.bf16.msra.mxu0 %v1840
    %2449 = vmatprep.subr.bf16.mxu0 0
    %2450 = vmatpush1.bf16.msra.mxu0 %v1833
    %2451 = vmatprep.subr.bf16.mxu0 0
    %2452 = vmatpush1.bf16.msra.mxu0 %v1826
    %2453 = vmatprep.subr.bf16.mxu0 0
    %2454 = vmatpush1.bf16.msra.mxu0 %v1819
    %2455 = vmatprep.subr.bf16.mxu0 0
    %2456 = vmatpush1.bf16.msra.mxu0 %v1812
    %2457 = vmatprep.subr.bf16.mxu0 0
    %2458 = vmatpush2.bf16.msra.mxu0 %v1917
    %2459 = vmatprep.subr.bf16.mxu0 0
    %2460 = vmatpush2.bf16.msra.mxu0 %v1910
    %2461 = vmatprep.subr.bf16.mxu0 0
    %2462 = vmatpush2.bf16.msra.mxu0 %v1903
    %2463 = vmatprep.subr.bf16.mxu0 0
    %2464 = vmatpush2.bf16.msra.mxu0 %v1896
    %2465 = vmatprep.subr.bf16.mxu0 0
    %2466 = vmatpush2.bf16.msra.mxu0 %v1889
    %2467 = vmatprep.subr.bf16.mxu0 0
    %2468 = vmatpush2.bf16.msra.mxu0 %v1882
    %2469 = vmatprep.subr.bf16.mxu0 0
    %2470 = vmatpush2.bf16.msra.mxu0 %v1875
    %2471 = vmatprep.subr.bf16.mxu0 0
    %2472 = vmatpush2.bf16.msra.mxu0 %v1868
    %2473 = vmatprep.mubr.bf16.mxu0 %v696
    %2474 = vmatmul.mubr.bf16.gmra.mxu0 %v695
    %v2475 = vpop.f32.mrf.mxu0
    %v2476 = vadd.f32 %v2435, %v2475
    %v2477 = vpop.f32.mrf.mxu0
    %v2478 = vpop.f32.mrf.mxu0
    %v2479 = vadd.f32 %v2438, %v2478
    %v2480 = vpop.f32.mrf.mxu0
    %2481 = vdwg.mxu0
    %v2482 = vtanh.pop %v2220
    %v2483 = vtanh.pop %v2222
    %v2484 = vtanh.pop %v2306
    %v2485 = vtanh.pop %v2308
    %v2486 = vtanh.pop %v2392
    %v2487 = vtanh.pop %v2394
    %v2488 = vtanh.pop %v2476
    %v2489 = vtanh.pop %v2224
    %v2490 = vtanh.pop %v2226
    %v2491 = vtanh.pop %v2310
    %v2492 = vtanh.pop %v2312
    %v2493 = vtanh.pop %v2396
    %v2494 = vtanh.pop %v2398
    %v2495 = vtanh.pop %v2479
    %v2496 = vpack.c.bf16 %v2489, %v2482
    %v2497 = vpack.c.bf16 %v2490, %v2483
    %v2498 = vpack.c.bf16 %v2491, %v2484
    %v2499 = vpack.c.bf16 %v2492, %v2485
    %v2500 = vpack.c.bf16 %v2493, %v2486
    %v2501 = vpack.c.bf16 %v2494, %v2487
    %v2502 = vpack.c.bf16 %v2495, %v2488
    %v2510 = vunpack.c.l.b16 %v2496
    %v2511 = vunpack.c.l.b16 %v2497
    %v2512 = vunpack.c.l.b16 %v2498
    %v2513 = vunpack.c.l.b16 %v2499
    %v2514 = vunpack.c.l.b16 %v2500
    %v2515 = vunpack.c.l.b16 %v2501
    %v2516 = vunpack.c.l.b16 %v2502
    %v2517 = vunpack.c.h.b16 %v2496
    %v2518 = vunpack.c.h.b16 %v2497
    %v2519 = vunpack.c.h.b16 %v2498
    %v2520 = vunpack.c.h.b16 %v2499
    %v2521 = vunpack.c.h.b16 %v2500
    %v2522 = vunpack.c.h.b16 %v2501
    %v2523 = vunpack.c.h.b16 %v2502
    %v2524 = vpack.c.b16 %v2511, %v2510
    %v2525 = vpack.c.b16 %v2513, %v2512
    %v2526 = vpack.c.b16 %v2515, %v2514
    %v2527 = vpack.c.b16 %v2516, %v2516
    %v2528 = vpack.c.b16 %v2518, %v2517
    %v2529 = vpack.c.b16 %v2520, %v2519
    %v2530 = vpack.c.b16 %v2522, %v2521
    %v2531 = vpack.c.b16 %v2523, %v2523
    %2540 = vst [vmem:[#allocation2] sm:$0xff] %v2524
    %2541 = vst [vmem:[#allocation2 + $0x8] sm:$0xff] %v2525
    %2542 = vst [vmem:[#allocation2 + $0x10] sm:$0xff] %v2526
    %vm2543 = vcmask 125952
    %2544 = vst.msk [vmem:[#allocation2 + $0x18] sm:$0xf] %vm2543, %v2527
    %2545 = vst [vmem:[#allocation2 + $0x1c] sm:$0xff] %v2528
    %2546 = vst [vmem:[#allocation2 + $0x24] sm:$0xff] %v2529
    %2547 = vst [vmem:[#allocation2 + $0x2c] sm:$0xff] %v2530
    %2548 = vst.msk [vmem:[#allocation2 + $0x34] sm:$0xf] %vm2543, %v2531
    // Predicated region
    $region30: #{tpu_custom_call.1} parent=1 // pred_check
      _
    $region31: #{tpu_custom_call.1} parent=1 // pred_check_branch
      %2550 = sbr.rel (0) target = $region33
    $region32: #{tpu_custom_call.1} parent=1 // pred_region
      %s2552 = ssub.s32 896, 896
      %2553 = vsyncadd [#allocation3], %s2552
      %s2554 = sshll.u32 [#allocation2], 4
      %s2555 = int_to_ptr.vmem [resolvable:$true] %s2554
      %2560 = dma.vmem_to_hbm [thread:$0]  %s2555, 896, %s7, [#allocation3], 448, 448, 28
    $region33: #{tpu_custom_call.1} parent=1 // pred_fallthru
      _
    // Predicated region
    $region34: #{tpu_custom_call.1} parent=1 // pred_check
      _
    $region35: #{tpu_custom_call.1} parent=1 // pred_check_branch
      %2562 = sbr.rel (0) target = $region37
    $region36: #{tpu_custom_call.1} parent=1 // pred_region
      %2563 = dma.done [#allocation3], 896
    $region37: #{tpu_custom_call.1} parent=1 // pred_fallthru
      _
    %2564 = vsyncpa [#allocation3], 1

</llo_original>
